<compile_context>
chip_gen: v5e
topology: v5e:2x2
jax: 0.10.0
libtpu: 0.0.40
codegen_flags: <defaults>
</compile_context>

<pallas_src>
import jax
import jax.numpy as jnp
from jax.experimental import pallas as pl
from jax.experimental.pallas import tpu as pltpu

BATCH_SIZE = 64          # matches the module's hard-coded x.view(BATCH_SIZE, -1)
IN_FEATURES = 784        # 1 * 28 * 28
H1 = 512
H2 = 256
OUT = 1

TM = 64                  # batch tile == BATCH_SIZE -> grid of (1,), no dead rows
OUT_PAD = 128            # lane-dense output slab; only lane 0 is real


def discriminator_kernel(x_ref, w1_ref, b1_ref, w2_hbm, b2_ref, w3_hbm, b3_ref,
                         o_ref, w2_buf, w3_buf, dma_sem):
    # Start w2/w3 HBM->VMEM copies immediately so they overlap layer-1's matmul.
    cp2 = pltpu.make_async_copy(w2_hbm, w2_buf, dma_sem.at[0])
    cp3 = pltpu.make_async_copy(w3_hbm, w3_buf, dma_sem.at[1])
    cp2.start()
    cp3.start()

    # Layer 1: bf16 MXU operands, f32 accumulation.  x arrives f32 and is cast
    # on the VPU (no wrapper-side pad/cast HBM round trip).
    x = x_ref[...].astype(jnp.bfloat16)                                 # (TM, 784)
    h1 = jnp.dot(x, w1_ref[...],
                 preferred_element_type=jnp.float32) + b1_ref[...]      # (TM, 512) f32

    # Layer 2 (w2 DMA has been hidden under the layer-1 matmul).
    cp2.wait()
    h2 = jnp.dot(h1.astype(jnp.bfloat16), w2_buf[...],
                 preferred_element_type=jnp.float32) + b2_ref[...]      # (TM, 256) f32

    # Layer 3 + sigmoid epilogue (f32 EUP path, v5e-safe).
    cp3.wait()
    logits = jnp.dot(h2.astype(jnp.bfloat16), w3_buf[...],
                     preferred_element_type=jnp.float32) + b3_ref[...]  # (TM, 128) f32
    o_ref[...] = jax.nn.sigmoid(logits)


def prepare_params(params):
    """Cast / pad natural-shape f32 params for the TPU kernel.

    w1: (784, 512) bf16 (no K padding)
    w2: (512, 256) bf16
    w3: (256, 1) -> (256, 128) bf16 (zero columns; only lane 0 real)
    biases stay f32; b3 padded to (1, 128).
    """
    w1, b1, w2, b2, w3, b3 = params
    w1p = w1.astype(jnp.bfloat16)
    w2p = w2.astype(jnp.bfloat16)
    w3p = jnp.pad(w3, ((0, 0), (0, OUT_PAD - OUT))).astype(jnp.bfloat16)
    b3p = jnp.pad(b3, ((0, 0), (0, OUT_PAD - OUT)))
    return (w1p, b1, w2p, b2, w3p, b3p)


def discriminator_forward(x_nchw, prepped_params):
    """x_nchw: (B, 1, 28, 28) float32 -> (B, 1) float32 sigmoid outputs."""
    w1, b1, w2, b2, w3, b3 = prepped_params
    b = x_nchw.shape[0]
    # == .view(BATCH_SIZE, -1); reshape is layout-free, no pad / cast here.
    x = x_nchw.reshape(b, IN_FEATURES).astype(jnp.float32)

    b_pad = pl.cdiv(b, TM) * TM
    if b_pad != b:
        x = jnp.pad(x, ((0, b_pad - b), (0, 0)))
    n_tiles = b_pad // TM                                     # 1 for B == 64

    grid_spec = pltpu.PrefetchScalarGridSpec(
        num_scalar_prefetch=0,
        grid=(n_tiles,),
        in_specs=[
            pl.BlockSpec((TM, IN_FEATURES), lambda i: (i, 0)),  # x: one batch tile
            pl.BlockSpec((IN_FEATURES, H1), lambda i: (0, 0)),  # w1 resident in VMEM
            pl.BlockSpec((1, H1), lambda i: (0, 0)),            # b1
            pl.BlockSpec(memory_space=pl.ANY),                  # w2: manual DMA
            pl.BlockSpec((1, H2), lambda i: (0, 0)),            # b2
            pl.BlockSpec(memory_space=pl.ANY),                  # w3: manual DMA
            pl.BlockSpec((1, OUT_PAD), lambda i: (0, 0)),       # b3
        ],
        out_specs=pl.BlockSpec((TM, OUT_PAD), lambda i: (i, 0)),
        scratch_shapes=[
            pltpu.VMEM((H1, H2), jnp.bfloat16),       # w2 landing buffer
            pltpu.VMEM((H2, OUT_PAD), jnp.bfloat16),  # w3 landing buffer
            pltpu.SemaphoreType.DMA((2,)),
        ],
    )

    flops = 2 * b_pad * (IN_FEATURES * H1 + H1 * H2 + H2 * OUT_PAD)
    bytes_accessed = (b_pad * IN_FEATURES * 4                            # x (f32)
                      + (IN_FEATURES * H1 + H1 * H2 + H2 * OUT_PAD) * 2  # weights (bf16)
                      + (H1 + H2 + OUT_PAD) * 4                          # biases (f32)
                      + b_pad * OUT_PAD * 4)                             # output (f32)

    out = pl.pallas_call(
        discriminator_kernel,
        out_shape=jax.ShapeDtypeStruct((b_pad, OUT_PAD), jnp.float32),
        grid_spec=grid_spec,
        # grid is (1,) at B=64: don't ask for a megacore split that would only
        # duplicate the dominant weight HBM traffic on this mem-bound kernel.
        compiler_params=pltpu.CompilerParams(
            dimension_semantics=("arbitrary",)),
        cost_estimate=pl.CostEstimate(
            flops=flops,
            transcendentals=b_pad * OUT_PAD,
            bytes_accessed=bytes_accessed),
    )(x, w1, b1, w2, b2, w3, b3)

    return out[:b, :OUT]                                      # (B, 1)


def init_params(key):
    """Deterministic init mimicking nn.Linear's default U(-1/sqrt(fan_in), ...)."""
    ks = jax.random.split(key, 6)

    def linear(kw, kb, fan_in, fan_out):
        bound = 1.0 / jnp.sqrt(fan_in)
        w = jax.random.uniform(kw, (fan_in, fan_out), jnp.float32, -bound, bound)
        b = jax.random.uniform(kb, (1, fan_out), jnp.float32, -bound, bound)
        return w, b

    w1, b1 = linear(ks[0], ks[1], IN_FEATURES, H1)
    w2, b2 = linear(ks[2], ks[3], H1, H2)
    w3, b3 = linear(ks[4], ks[5], H2, OUT)
    return (w1, b1, w2, b2, w3, b3)


def reference_forward(x_nchw, params):
    w1, b1, w2, b2, w3, b3 = params
    x = x_nchw.reshape(x_nchw.shape[0], -1).astype(jnp.float32)
    h1 = x @ w1 + b1
    h2 = h1 @ w2 + b2
    return jax.nn.sigmoid(h2 @ w3 + b3)


if __name__ == "__main__":
    key = jax.random.PRNGKey(0)
    k_params, k_x = jax.random.split(key)

    params = init_params(k_params)
    prepped = prepare_params(params)
    # The module hard-codes x.view(BATCH_SIZE, -1), so the consistent input
    # shape is (64, 1, 28, 28).
    x = jax.random.normal(k_x, (BATCH_SIZE, 1, 28, 28), jnp.float32)

    out = discriminator_forward(x, prepped)
    out = jax.block_until_ready(out)

    ref = reference_forward(x, params)
    assert out.shape == (BATCH_SIZE, OUT)
    # bf16 MXU operands vs. the f32 reference -> relaxed tolerance.
    assert jnp.allclose(out, ref, atol=2e-2, rtol=0.0), \
        float(jnp.max(jnp.abs(out - ref)))

    print("KERNEL_OK")
</pallas_src>

<mosaic_0001>
module attributes {stable_mosaic.version = 11 : i64} {
  func.func @discriminator_kernel(%arg0: i32, %arg1: memref<64x784xf32, #tpu.memory_space<vmem>>, %arg2: memref<784x512xbf16, #tpu.memory_space<vmem>>, %arg3: memref<1x512xf32, #tpu.memory_space<vmem>>, %arg4: memref<512x256xbf16, #tpu.memory_space<any>>, %arg5: memref<1x256xf32, #tpu.memory_space<vmem>>, %arg6: memref<256x128xbf16, #tpu.memory_space<any>>, %arg7: memref<1x128xf32, #tpu.memory_space<vmem>>, %arg8: memref<64x128xf32, #tpu.memory_space<vmem>>, %arg9: memref<512x256xbf16, #tpu.memory_space<vmem>>, %arg10: memref<256x128xbf16, #tpu.memory_space<vmem>>, %arg11: memref<2x!tpu.dma_semaphore, #tpu.memory_space<semaphore_mem>>) attributes {dimension_semantics = [#tpu.dimension_semantics<arbitrary>], iteration_bounds = array<i64: 1>, scalar_prefetch = 0 : i64, scratch_operands = 3 : i64, tpu.core_type = #tpu.core_type<tc>, window_params = [{transform_indices = @transform_0, window_bounds = array<i64: 64, 784>}, {pipeline_mode = #tpu.pipeline_mode<synchronous>, transform_indices = @transform_1, window_bounds = array<i64: 784, 512>}, {pipeline_mode = #tpu.pipeline_mode<synchronous>, transform_indices = @transform_2, window_bounds = array<i64: 1, 512>}, {}, {pipeline_mode = #tpu.pipeline_mode<synchronous>, transform_indices = @transform_4, window_bounds = array<i64: 1, 256>}, {}, {pipeline_mode = #tpu.pipeline_mode<synchronous>, transform_indices = @transform_6, window_bounds = array<i64: 1, 128>}, {transform_indices = @transform_7, window_bounds = array<i64: 64, 128>}]} {
    %c0_i32 = arith.constant 0 : i32
    %0 = tpu.memref_slice %arg11[%c0_i32] : memref<2x!tpu.dma_semaphore, #tpu.memory_space<semaphore_mem>> -> memref<1x!tpu.dma_semaphore, #tpu.memory_space<semaphore_mem>>
    %1 = tpu.memref_squeeze %0 : memref<1x!tpu.dma_semaphore, #tpu.memory_space<semaphore_mem>> -> memref<!tpu.dma_semaphore, #tpu.memory_space<semaphore_mem>>
    tpu.enqueue_dma source(%arg4 : memref<512x256xbf16, #tpu.memory_space<any>>) target(%arg9 : memref<512x256xbf16, #tpu.memory_space<vmem>>) target_semaphore(%1 : memref<!tpu.dma_semaphore, #tpu.memory_space<semaphore_mem>>)
    %c1_i32 = arith.constant 1 : i32
    %2 = tpu.memref_slice %arg11[%c1_i32] : memref<2x!tpu.dma_semaphore, #tpu.memory_space<semaphore_mem>> -> memref<1x!tpu.dma_semaphore, #tpu.memory_space<semaphore_mem>>
    %3 = tpu.memref_squeeze %2 : memref<1x!tpu.dma_semaphore, #tpu.memory_space<semaphore_mem>> -> memref<!tpu.dma_semaphore, #tpu.memory_space<semaphore_mem>>
    tpu.enqueue_dma source(%arg6 : memref<256x128xbf16, #tpu.memory_space<any>>) target(%arg10 : memref<256x128xbf16, #tpu.memory_space<vmem>>) target_semaphore(%3 : memref<!tpu.dma_semaphore, #tpu.memory_space<semaphore_mem>>)
    %c0 = arith.constant 0 : index
    %c0_0 = arith.constant 0 : index
    %4 = vector.load %arg1[%c0, %c0_0] : memref<64x784xf32, #tpu.memory_space<vmem>>, vector<64x784xf32>
    %5 = arith.truncf %4 : vector<64x784xf32> to vector<64x784xbf16>
    %c0_1 = arith.constant 0 : index
    %c0_2 = arith.constant 0 : index
    %6 = vector.load %arg2[%c0_1, %c0_2] : memref<784x512xbf16, #tpu.memory_space<vmem>>, vector<784x512xbf16>
    %cst = arith.constant dense<0.000000e+00> : vector<64x512xf32>
    %7 = tpu.matmul %5, %6, %cst {dimension_numbers = #tpu.dot_dimension_numbers<[1], [0], [0], [1], [0, 0, 1, 1], [], []>} : vector<64x784xbf16>, vector<784x512xbf16>, vector<64x512xf32> -> vector<64x512xf32>
    %c0_3 = arith.constant 0 : index
    %c0_4 = arith.constant 0 : index
    %8 = vector.load %arg3[%c0_3, %c0_4] : memref<1x512xf32, #tpu.memory_space<vmem>>, vector<1x512xf32>
    %9 = vector.broadcast %8 : vector<1x512xf32> to vector<64x512xf32>
    %10 = arith.addf %7, %9 : vector<64x512xf32>
    %c0_i32_5 = arith.constant 0 : i32
    %11 = tpu.memref_slice %arg11[%c0_i32_5] : memref<2x!tpu.dma_semaphore, #tpu.memory_space<semaphore_mem>> -> memref<1x!tpu.dma_semaphore, #tpu.memory_space<semaphore_mem>>
    %12 = tpu.memref_squeeze %11 : memref<1x!tpu.dma_semaphore, #tpu.memory_space<semaphore_mem>> -> memref<!tpu.dma_semaphore, #tpu.memory_space<semaphore_mem>>
    tpu.wait_dma2 semaphore(%12 : memref<!tpu.dma_semaphore, #tpu.memory_space<semaphore_mem>>) src(%arg4 : memref<512x256xbf16, #tpu.memory_space<any>>) dst(%arg9 : memref<512x256xbf16, #tpu.memory_space<vmem>>)
    %13 = arith.truncf %10 : vector<64x512xf32> to vector<64x512xbf16>
    %c0_6 = arith.constant 0 : index
    %c0_7 = arith.constant 0 : index
    %14 = vector.load %arg9[%c0_6, %c0_7] : memref<512x256xbf16, #tpu.memory_space<vmem>>, vector<512x256xbf16>
    %cst_8 = arith.constant dense<0.000000e+00> : vector<64x256xf32>
    %15 = tpu.matmul %13, %14, %cst_8 {dimension_numbers = #tpu.dot_dimension_numbers<[1], [0], [0], [1], [0, 0, 1, 1], [], []>} : vector<64x512xbf16>, vector<512x256xbf16>, vector<64x256xf32> -> vector<64x256xf32>
    %c0_9 = arith.constant 0 : index
    %c0_10 = arith.constant 0 : index
    %16 = vector.load %arg5[%c0_9, %c0_10] : memref<1x256xf32, #tpu.memory_space<vmem>>, vector<1x256xf32>
    %17 = vector.broadcast %16 : vector<1x256xf32> to vector<64x256xf32>
    %18 = arith.addf %15, %17 : vector<64x256xf32>
    %c1_i32_11 = arith.constant 1 : i32
    %19 = tpu.memref_slice %arg11[%c1_i32_11] : memref<2x!tpu.dma_semaphore, #tpu.memory_space<semaphore_mem>> -> memref<1x!tpu.dma_semaphore, #tpu.memory_space<semaphore_mem>>
    %20 = tpu.memref_squeeze %19 : memref<1x!tpu.dma_semaphore, #tpu.memory_space<semaphore_mem>> -> memref<!tpu.dma_semaphore, #tpu.memory_space<semaphore_mem>>
    tpu.wait_dma2 semaphore(%20 : memref<!tpu.dma_semaphore, #tpu.memory_space<semaphore_mem>>) src(%arg6 : memref<256x128xbf16, #tpu.memory_space<any>>) dst(%arg10 : memref<256x128xbf16, #tpu.memory_space<vmem>>)
    %21 = arith.truncf %18 : vector<64x256xf32> to vector<64x256xbf16>
    %c0_12 = arith.constant 0 : index
    %c0_13 = arith.constant 0 : index
    %22 = vector.load %arg10[%c0_12, %c0_13] : memref<256x128xbf16, #tpu.memory_space<vmem>>, vector<256x128xbf16>
    %cst_14 = arith.constant dense<0.000000e+00> : vector<64x128xf32>
    %23 = tpu.matmul %21, %22, %cst_14 {dimension_numbers = #tpu.dot_dimension_numbers<[1], [0], [0], [1], [0, 0, 1, 1], [], []>} : vector<64x256xbf16>, vector<256x128xbf16>, vector<64x128xf32> -> vector<64x128xf32>
    %c0_15 = arith.constant 0 : index
    %c0_16 = arith.constant 0 : index
    %24 = vector.load %arg7[%c0_15, %c0_16] : memref<1x128xf32, #tpu.memory_space<vmem>>, vector<1x128xf32>
    %25 = vector.broadcast %24 : vector<1x128xf32> to vector<64x128xf32>
    %26 = arith.addf %23, %25 : vector<64x128xf32>
    %27 = arith.negf %26 : vector<64x128xf32>
    %28 = math.exp %27 : vector<64x128xf32>
    %cst_17 = arith.constant 1.000000e+00 : f32
    %29 = vector.broadcast %cst_17 : f32 to vector<64x128xf32>
    %30 = arith.addf %29, %28 : vector<64x128xf32>
    %31 = arith.divf %29, %30 : vector<64x128xf32>
    %c0_18 = arith.constant 0 : index
    %c0_19 = arith.constant 0 : index
    %32 = vector.load %arg8[%c0_18, %c0_19] : memref<64x128xf32, #tpu.memory_space<vmem>>, vector<64x128xf32>
    tpu.vector_store %arg8[%c0_18, %c0_19], %31 {strides = array<i32>} : memref<64x128xf32, #tpu.memory_space<vmem>>, vector<64x128xf32>,
    return
  }
  func.func @transform_0(%arg0: i32) -> (i32, i32) {
    %c0_i32 = arith.constant 0 : i32
    %c0_i32_0 = arith.constant 0 : i32
    return %arg0, %c0_i32 : i32, i32
  }
  func.func @transform_1(%arg0: i32) -> (i32, i32) {
    %c0_i32 = arith.constant 0 : i32
    %c0_i32_0 = arith.constant 0 : i32
    %c0_i32_1 = arith.constant 0 : i32
    return %c0_i32, %c0_i32_0 : i32, i32
  }
  func.func @transform_2(%arg0: i32) -> (i32, i32) {
    %c0_i32 = arith.constant 0 : i32
    %c0_i32_0 = arith.constant 0 : i32
    %c0_i32_1 = arith.constant 0 : i32
    return %c0_i32, %c0_i32_0 : i32, i32
  }
  func.func @transform_4(%arg0: i32) -> (i32, i32) {
    %c0_i32 = arith.constant 0 : i32
    %c0_i32_0 = arith.constant 0 : i32
    %c0_i32_1 = arith.constant 0 : i32
    return %c0_i32, %c0_i32_0 : i32, i32
  }
  func.func @transform_6(%arg0: i32) -> (i32, i32) {
    %c0_i32 = arith.constant 0 : i32
    %c0_i32_0 = arith.constant 0 : i32
    %c0_i32_1 = arith.constant 0 : i32
    return %c0_i32, %c0_i32_0 : i32, i32
  }
  func.func @transform_7(%arg0: i32) -> (i32, i32) {
    %c0_i32 = arith.constant 0 : i32
    %c0_i32_0 = arith.constant 0 : i32
    return %arg0, %c0_i32 : i32, i32
  }
}

</mosaic_0001>

<llo_original>
// kernel: tpu_custom_call.1
$region0: #{tpu_custom_call.1}
  #allocation0 [shape = 'u32[]', space=smem, size = 0x4, offset = 0x4, fixed_abs, tag = 'smem constant byte address 0x4 - core index']
  #allocation1 [shape = 'u32[72,128]{1,0:T(1,128)}', space=vmem, size = 0x9000, scoped, tag = 'internal scratch']
  #allocation2 [shape = 'bf16[512,256]{1,0:T(8,128)(2,1)}', space=vmem, size = 0x40000, scoped, tag = 'scratch operand']
  #allocation3 [shape = 'bf16[256,128]{1,0:T(8,128)(2,1)}', space=vmem, size = 0x10000, scoped, tag = 'scratch operand']
  #allocation4 [shape = 's32[2]{0}', space=sflag, size = 0x8, scoped, tag = 'scratch operand']
  #allocation12 [shape = 's32[]', space=sflag, size = 0x4, offset = 0, fixed_abs, tag = 'sflag constant byte address 0x0 - dummy sync flag']
  #allocation13 [shape = 's32[]', space=sflag, size = 0x4, offset = 0, fixed_abs, tag = 'sflag constant byte address 0x0 - dummy sync flag']
  #allocation14 [shape = 'u32[]', space=smem, size = 0x4, offset = 0x44, fixed_abs, tag = 'smem constant byte address 0x44 - assertion arg 0']
  #allocation15 [shape = 'u32[]', space=smem, size = 0x4, offset = 0x48, fixed_abs, tag = 'smem constant byte address 0x48 - assertion arg 1']
  #allocation16 [shape = 's32[]', space=sflag, size = 0x4, offset = 0, fixed_abs, tag = 'sflag constant byte address 0x0 - dummy sync flag']
  #allocation17 [shape = 's32[]', space=sflag, size = 0x4, offset = 0, fixed_abs, tag = 'sflag constant byte address 0x0 - dummy sync flag']
  %s0 = inlined_call_operand.hbm [shape: f32[64,784], index: 0, kind: input, shape index: {}]
  %s1 = inlined_call_operand.hbm [shape: bf16[784,512], index: 1, kind: input, shape index: {}]
  %s2 = inlined_call_operand.hbm [shape: f32[1,512], index: 2, kind: input, shape index: {}]
  %s3 = inlined_call_operand.hbm [shape: bf16[512,256], index: 3, kind: input, shape index: {}]
  %s4 = inlined_call_operand.vmem [shape: f32[1,256], index: 4, kind: input, shape index: {}]
  %s5 = inlined_call_operand.hbm [shape: bf16[256,128], index: 5, kind: input, shape index: {}]
  %s6 = inlined_call_operand.vmem [shape: f32[1,128], index: 6, kind: input, shape index: {}]
  %s7 = inlined_call_operand.hbm [shape: f32[64,128], index: 7, kind: output, shape index: {}]
  %s8 = sld [smem:[#allocation0]]
  $region50: #{tpu_custom_call.1} parent=0
    _
  %s10 = ssub.s32 1, %s8
  %s11 = scalar_select 0, %s10, %s8
  $region1: #{tpu_custom_call.1} parent=0
    #allocation5 [shape = 'u8[229376]{0}', space=vmem, size = 0x38000, scoped, tag = 'input window, operand 0, single buffered']
    #allocation6 [shape = 's32[1]{0}', space=sflag, size = 0x4, scoped, tag = 'scoped memory for tpu_custom_call.1']
    #allocation7 [shape = 's32[1]{0}', space=sflag, size = 0x4, scoped, tag = 'scoped memory for tpu_custom_call.1']
    #allocation8 [shape = 'u8[802816]{0}', space=vmem, size = 0xc4000, scoped, tag = 'input window, operand 1, single buffered']
    #allocation9 [shape = 's32[1]{0}', space=sflag, size = 0x4, scoped, tag = 'scoped memory for tpu_custom_call.1']
    #allocation10 [shape = 'u8[2048]{0}', space=vmem, size = 0x800, scoped, tag = 'input window, operand 2, single buffered']
    #allocation11 [shape = 'u8[32768]{0}', space=vmem, size = 0x8000, scoped, tag = 'output window, operand 0, single buffered']
    %12 = vsyncpa [#allocation6], 0
    %13 = vsyncpa [#allocation9], 0
    %14 = vsyncpa [#allocation7], 0
    // Predicated region
    $region2: #{tpu_custom_call.1} parent=1 // pred_check
      _
    $region3: #{tpu_custom_call.1} parent=1 // pred_check_branch
      %16 = sbr.rel (0) target = $region5
    $region4: #{tpu_custom_call.1} parent=1 // pred_region
      %18 = vsyncadd [#allocation6], 0
      %s19 = sshll.u32 %s0, 4
      %s20 = int_to_ptr.hbm [resolvable:$true] %s19
      %s21 = sshll.u32 [#allocation5], 4
      %s22 = int_to_ptr.vmem [resolvable:$true] %s21
      %27 = dma.hbm_to_vmem [thread:$0]  %s20, 7168, %s22, [#allocation6], 896, 896, 56
    $region5: #{tpu_custom_call.1} parent=1 // pred_fallthru
      _
    // Predicated region
    $region6: #{tpu_custom_call.1} parent=1 // pred_check
      _
    $region7: #{tpu_custom_call.1} parent=1 // pred_check_branch
      %29 = sbr.rel (0) target = $region9
    $region8: #{tpu_custom_call.1} parent=1 // pred_region
      %31 = vsyncadd [#allocation9], 0
      %s32 = sshll.u32 %s1, 4
      %s33 = int_to_ptr.hbm [resolvable:$true] %s32
      %s34 = sshll.u32 [#allocation8], 4
      %s35 = int_to_ptr.vmem [resolvable:$true] %s34
      %40 = dma.hbm_to_vmem [thread:$0]  %s33, 25088, %s35, [#allocation9], 256, 256, 16
    $region9: #{tpu_custom_call.1} parent=1 // pred_fallthru
      _
    // Predicated region
    $region10: #{tpu_custom_call.1} parent=1 // pred_check
      _
    $region11: #{tpu_custom_call.1} parent=1 // pred_check_branch
      %42 = sbr.rel (0) target = $region13
    $region12: #{tpu_custom_call.1} parent=1 // pred_region
      %44 = vsyncadd [#allocation9], 0
      %s46 = sshll.u32 %s2, 4
      %s47 = int_to_ptr.hbm [resolvable:$true] %s46
      %s48 = sshll.u32 [#allocation10], 4
      %s49 = int_to_ptr.vmem [resolvable:$true] %s48
      %51 = dma.hbm_to_vmem [thread:$0]  %s47, 64, %s49, [#allocation9]
    $region13: #{tpu_custom_call.1} parent=1 // pred_fallthru
      _
    // Predicated region
    $region14: #{tpu_custom_call.1} parent=1 // pred_check
      _
    $region15: #{tpu_custom_call.1} parent=1 // pred_check_branch
      %53 = sbr.rel (0) target = $region17
    $region16: #{tpu_custom_call.1} parent=1 // pred_region
      _
    $region17: #{tpu_custom_call.1} parent=1 // pred_fallthru
      _
    // Predicated region
    $region18: #{tpu_custom_call.1} parent=1 // pred_check
      _
    $region19: #{tpu_custom_call.1} parent=1 // pred_check_branch
      %55 = sbr.rel (0) target = $region21
    $region20: #{tpu_custom_call.1} parent=1 // pred_region
      _
    $region21: #{tpu_custom_call.1} parent=1 // pred_fallthru
      _
    // Predicated region
    $region22: #{tpu_custom_call.1} parent=1 // pred_check
      _
    $region23: #{tpu_custom_call.1} parent=1 // pred_check_branch
      %57 = sbr.rel (0) target = $region25
    $region24: #{tpu_custom_call.1} parent=1 // pred_region
      %59 = dma.done [#allocation6], 7168
    $region25: #{tpu_custom_call.1} parent=1 // pred_fallthru
      _
    // Predicated region
    $region26: #{tpu_custom_call.1} parent=1 // pred_check
      _
    $region27: #{tpu_custom_call.1} parent=1 // pred_check_branch
      %61 = sbr.rel (0) target = $region29
    $region28: #{tpu_custom_call.1} parent=1 // pred_region
      %63 = dma.done [#allocation9], 25088
    $region29: #{tpu_custom_call.1} parent=1 // pred_fallthru
      _
    // Predicated region
    $region30: #{tpu_custom_call.1} parent=1 // pred_check
      _
    $region31: #{tpu_custom_call.1} parent=1 // pred_check_branch
      %65 = sbr.rel (0) target = $region33
    $region32: #{tpu_custom_call.1} parent=1 // pred_region
      %67 = dma.done [#allocation9], 64
    $region33: #{tpu_custom_call.1} parent=1 // pred_fallthru
      _
    // Predicated region
    $region34: #{tpu_custom_call.1} parent=1 // pred_check
      _
    $region35: #{tpu_custom_call.1} parent=1 // pred_check_branch
      %70 = sbr.rel target = $region37
    $region36: #{tpu_custom_call.1} parent=1 // pred_region
      %71 = sst [smem:[#allocation14]] [#allocation13]
      %72 = sst [smem:[#allocation15]] [#allocation12]
    $region37: #{tpu_custom_call.1} parent=1 // pred_fallthru
      _
    %74 = shalt.err (0)
    %s76 = sshll.u32 %s3, 4
    %s77 = int_to_ptr.hbm [resolvable:$true] %s76
    %s78 = sshll.u32 [#allocation2], 4
    %s79 = int_to_ptr.vmem [resolvable:$true] %s78
    %81 = dma.hbm_to_vmem [thread:$0]  %s77, 8192, %s79, [#allocation4]
    %s82 = scalar_lea.sflag [#allocation4], 1
    // Predicated region
    $region38: #{tpu_custom_call.1} parent=1 // pred_check
      _
    $region39: #{tpu_custom_call.1} parent=1 // pred_check_branch
      %84 = sbr.rel target = $region41
    $region40: #{tpu_custom_call.1} parent=1 // pred_region
      %85 = sst [smem:[#allocation14]] [#allocation17]
      %86 = sst [smem:[#allocation15]] [#allocation16]
    $region41: #{tpu_custom_call.1} parent=1 // pred_fallthru
      _
    %88 = shalt.err (0)
    %s90 = sshll.u32 %s5, 4
    %s91 = int_to_ptr.hbm [resolvable:$true] %s90
    %s92 = sshll.u32 [#allocation3], 4
    %s93 = int_to_ptr.vmem [resolvable:$true] %s92
    %95 = dma.hbm_to_vmem [thread:$0]  %s91, 2048, %s93, %s82
    %v96 = vld [vmem:[#allocation5] sm:$0xff]
    %v97 = vld [vmem:[#allocation5 + $0x8] sm:$0xff]
    %v98 = vld [vmem:[#allocation5 + $0x10] sm:$0xff]
    %v99 = vld [vmem:[#allocation5 + $0x18] sm:$0xff]
    %v100 = vld [vmem:[#allocation5 + $0x20] sm:$0xff]
    %v101 = vld [vmem:[#allocation5 + $0x28] sm:$0xff]
    %v102 = vld [vmem:[#allocation5 + $0x30] sm:$0xff]
    %v103 = vld [vmem:[#allocation5 + $0x38] sm:$0xff]
    %v104 = vld [vmem:[#allocation5 + $0x40] sm:$0xff]
    %v105 = vld [vmem:[#allocation5 + $0x48] sm:$0xff]
    %v106 = vld [vmem:[#allocation5 + $0x50] sm:$0xff]
    %v107 = vld [vmem:[#allocation5 + $0x58] sm:$0xff]
    %v108 = vld [vmem:[#allocation5 + $0x60] sm:$0xff]
    %v109 = vld [vmem:[#allocation5 + $0x68] sm:$0xff]
    %v110 = vld [vmem:[#allocation5 + $0x70] sm:$0xff]
    %v111 = vld [vmem:[#allocation5 + $0x78] sm:$0xff]
    %v112 = vld [vmem:[#allocation5 + $0x80] sm:$0xff]
    %v113 = vld [vmem:[#allocation5 + $0x88] sm:$0xff]
    %v114 = vld [vmem:[#allocation5 + $0x90] sm:$0xff]
    %v115 = vld [vmem:[#allocation5 + $0x98] sm:$0xff]
    %v116 = vld [vmem:[#allocation5 + $0xa0] sm:$0xff]
    %v117 = vld [vmem:[#allocation5 + $0xa8] sm:$0xff]
    %v118 = vld [vmem:[#allocation5 + $0xb0] sm:$0xff]
    %v119 = vld [vmem:[#allocation5 + $0xb8] sm:$0xff]
    %v120 = vld [vmem:[#allocation5 + $0xc0] sm:$0xff]
    %v121 = vld [vmem:[#allocation5 + $0xc8] sm:$0xff]
    %v122 = vld [vmem:[#allocation5 + $0xd0] sm:$0xff]
    %v123 = vld [vmem:[#allocation5 + $0xd8] sm:$0xff]
    %v124 = vld [vmem:[#allocation5 + $0xe0] sm:$0xff]
    %v125 = vld [vmem:[#allocation5 + $0xe8] sm:$0xff]
    %v126 = vld [vmem:[#allocation5 + $0xf0] sm:$0xff]
    %v127 = vld [vmem:[#allocation5 + $0xf8] sm:$0xff]
    %v128 = vld [vmem:[#allocation5 + $0x100] sm:$0xff]
    %v129 = vld [vmem:[#allocation5 + $0x108] sm:$0xff]
    %v130 = vld [vmem:[#allocation5 + $0x110] sm:$0xff]
    %v131 = vld [vmem:[#allocation5 + $0x118] sm:$0xff]
    %v132 = vld [vmem:[#allocation5 + $0x120] sm:$0xff]
    %v133 = vld [vmem:[#allocation5 + $0x128] sm:$0xff]
    %v134 = vld [vmem:[#allocation5 + $0x130] sm:$0xff]
    %v135 = vld [vmem:[#allocation5 + $0x138] sm:$0xff]
    %v136 = vld [vmem:[#allocation5 + $0x140] sm:$0xff]
    %v137 = vld [vmem:[#allocation5 + $0x148] sm:$0xff]
    %v138 = vld [vmem:[#allocation5 + $0x150] sm:$0xff]
    %v139 = vld [vmem:[#allocation5 + $0x158] sm:$0xff]
    %v140 = vld [vmem:[#allocation5 + $0x160] sm:$0xff]
    %v141 = vld [vmem:[#allocation5 + $0x168] sm:$0xff]
    %v142 = vld [vmem:[#allocation5 + $0x170] sm:$0xff]
    %v143 = vld [vmem:[#allocation5 + $0x178] sm:$0xff]
    %v144 = vld [vmem:[#allocation5 + $0x180] sm:$0xff]
    %v145 = vld [vmem:[#allocation5 + $0x188] sm:$0xff]
    %v146 = vld [vmem:[#allocation5 + $0x190] sm:$0xff]
    %v147 = vld [vmem:[#allocation5 + $0x198] sm:$0xff]
    %v148 = vld [vmem:[#allocation5 + $0x1a0] sm:$0xff]
    %v149 = vld [vmem:[#allocation5 + $0x1a8] sm:$0xff]
    %v150 = vld [vmem:[#allocation5 + $0x1b0] sm:$0xff]
    %v151 = vld [vmem:[#allocation5 + $0x1b8] sm:$0xff]
    %v152 = vpack.c.bf16 %v103, %v96
    %v153 = vpack.c.bf16 %v104, %v97
    %v154 = vpack.c.bf16 %v105, %v98
    %v155 = vpack.c.bf16 %v106, %v99
    %v156 = vpack.c.bf16 %v107, %v100
    %v157 = vpack.c.bf16 %v108, %v101
    %v158 = vpack.c.bf16 %v109, %v102
    %v159 = vpack.c.bf16 %v117, %v110
    %v160 = vpack.c.bf16 %v118, %v111
    %v161 = vpack.c.bf16 %v119, %v112
    %v162 = vpack.c.bf16 %v120, %v113
    %v163 = vpack.c.bf16 %v121, %v114
    %v164 = vpack.c.bf16 %v122, %v115
    %v165 = vpack.c.bf16 %v123, %v116
    %v166 = vpack.c.bf16 %v131, %v124
    %v167 = vpack.c.bf16 %v132, %v125
    %v168 = vpack.c.bf16 %v133, %v126
    %v169 = vpack.c.bf16 %v134, %v127
    %v170 = vpack.c.bf16 %v135, %v128
    %v171 = vpack.c.bf16 %v136, %v129
    %v172 = vpack.c.bf16 %v137, %v130
    %v173 = vpack.c.bf16 %v145, %v138
    %v174 = vpack.c.bf16 %v146, %v139
    %v175 = vpack.c.bf16 %v147, %v140
    %v176 = vpack.c.bf16 %v148, %v141
    %v177 = vpack.c.bf16 %v149, %v142
    %v178 = vpack.c.bf16 %v150, %v143
    %v179 = vpack.c.bf16 %v151, %v144
    %v180 = vld [vmem:[#allocation8] sm:$0xff]
    %v181 = vld [vmem:[#allocation8 + $0x8] sm:$0xff]
    %v182 = vld [vmem:[#allocation8 + $0x10] sm:$0xff]
    %v183 = vld [vmem:[#allocation8 + $0x18] sm:$0xff]
    %v184 = vld [vmem:[#allocation8 + $0x20] sm:$0xff]
    %v185 = vld [vmem:[#allocation8 + $0x28] sm:$0xff]
    %v186 = vld [vmem:[#allocation8 + $0x30] sm:$0xff]
    %v187 = vld [vmem:[#allocation8 + $0x38] sm:$0xff]
    %v188 = vld [vmem:[#allocation8 + $0x40] sm:$0xff]
    %v189 = vld [vmem:[#allocation8 + $0x48] sm:$0xff]
    %v190 = vld [vmem:[#allocation8 + $0x50] sm:$0xff]
    %v191 = vld [vmem:[#allocation8 + $0x58] sm:$0xff]
    %v192 = vld [vmem:[#allocation8 + $0x60] sm:$0xff]
    %v193 = vld [vmem:[#allocation8 + $0x68] sm:$0xff]
    %v194 = vld [vmem:[#allocation8 + $0x70] sm:$0xff]
    %v195 = vld [vmem:[#allocation8 + $0x78] sm:$0xff]
    %v196 = vld [vmem:[#allocation8 + $0x80] sm:$0xff]
    %v197 = vld [vmem:[#allocation8 + $0x88] sm:$0xff]
    %v198 = vld [vmem:[#allocation8 + $0x90] sm:$0xff]
    %v199 = vld [vmem:[#allocation8 + $0x98] sm:$0xff]
    %v200 = vld [vmem:[#allocation8 + $0xa0] sm:$0xff]
    %v201 = vld [vmem:[#allocation8 + $0xa8] sm:$0xff]
    %v202 = vld [vmem:[#allocation8 + $0xb0] sm:$0xff]
    %v203 = vld [vmem:[#allocation8 + $0xb8] sm:$0xff]
    %v204 = vld [vmem:[#allocation8 + $0xc0] sm:$0xff]
    %v205 = vld [vmem:[#allocation8 + $0xc8] sm:$0xff]
    %v206 = vld [vmem:[#allocation8 + $0xd0] sm:$0xff]
    %v207 = vld [vmem:[#allocation8 + $0xd8] sm:$0xff]
    %v208 = vld [vmem:[#allocation8 + $0xe0] sm:$0xff]
    %v209 = vld [vmem:[#allocation8 + $0xe8] sm:$0xff]
    %v210 = vld [vmem:[#allocation8 + $0xf0] sm:$0xff]
    %v211 = vld [vmem:[#allocation8 + $0xf8] sm:$0xff]
    %v212 = vld [vmem:[#allocation8 + $0x100] sm:$0xff]
    %v213 = vld [vmem:[#allocation8 + $0x108] sm:$0xff]
    %v214 = vld [vmem:[#allocation8 + $0x110] sm:$0xff]
    %v215 = vld [vmem:[#allocation8 + $0x118] sm:$0xff]
    %v216 = vld [vmem:[#allocation8 + $0x120] sm:$0xff]
    %v217 = vld [vmem:[#allocation8 + $0x128] sm:$0xff]
    %v218 = vld [vmem:[#allocation8 + $0x130] sm:$0xff]
    %v219 = vld [vmem:[#allocation8 + $0x138] sm:$0xff]
    %v220 = vld [vmem:[#allocation8 + $0x140] sm:$0xff]
    %v221 = vld [vmem:[#allocation8 + $0x148] sm:$0xff]
    %v222 = vld [vmem:[#allocation8 + $0x150] sm:$0xff]
    %v223 = vld [vmem:[#allocation8 + $0x158] sm:$0xff]
    %v224 = vld [vmem:[#allocation8 + $0x160] sm:$0xff]
    %v225 = vld [vmem:[#allocation8 + $0x168] sm:$0xff]
    %v226 = vld [vmem:[#allocation8 + $0x170] sm:$0xff]
    %v227 = vld [vmem:[#allocation8 + $0x178] sm:$0xff]
    %v228 = vld [vmem:[#allocation8 + $0x180] sm:$0xff]
    %v229 = vld [vmem:[#allocation8 + $0x188] sm:$0xff]
    %v230 = vld [vmem:[#allocation8 + $0x190] sm:$0xff]
    %v231 = vld [vmem:[#allocation8 + $0x198] sm:$0xff]
    %v232 = vld [vmem:[#allocation8 + $0x1a0] sm:$0xff]
    %v233 = vld [vmem:[#allocation8 + $0x1a8] sm:$0xff]
    %v234 = vld [vmem:[#allocation8 + $0x1b0] sm:$0xff]
    %v235 = vld [vmem:[#allocation8 + $0x1b8] sm:$0xff]
    %v236 = vld [vmem:[#allocation8 + $0x1c0] sm:$0xff]
    %v237 = vld [vmem:[#allocation8 + $0x1c8] sm:$0xff]
    %v238 = vld [vmem:[#allocation8 + $0x1d0] sm:$0xff]
    %v239 = vld [vmem:[#allocation8 + $0x1d8] sm:$0xff]
    %v240 = vld [vmem:[#allocation8 + $0x1e0] sm:$0xff]
    %v241 = vld [vmem:[#allocation8 + $0x1e8] sm:$0xff]
    %v242 = vld [vmem:[#allocation8 + $0x1f0] sm:$0xff]
    %v243 = vld [vmem:[#allocation8 + $0x1f8] sm:$0xff]
    %v244 = vld [vmem:[#allocation8 + $0x200] sm:$0xff]
    %v245 = vld [vmem:[#allocation8 + $0x208] sm:$0xff]
    %v246 = vld [vmem:[#allocation8 + $0x210] sm:$0xff]
    %v247 = vld [vmem:[#allocation8 + $0x218] sm:$0xff]
    %v248 = vld [vmem:[#allocation8 + $0x220] sm:$0xff]
    %v249 = vld [vmem:[#allocation8 + $0x228] sm:$0xff]
    %v250 = vld [vmem:[#allocation8 + $0x230] sm:$0xff]
    %v251 = vld [vmem:[#allocation8 + $0x238] sm:$0xff]
    %v252 = vld [vmem:[#allocation8 + $0x240] sm:$0xff]
    %v253 = vld [vmem:[#allocation8 + $0x248] sm:$0xff]
    %v254 = vld [vmem:[#allocation8 + $0x250] sm:$0xff]
    %v255 = vld [vmem:[#allocation8 + $0x258] sm:$0xff]
    %v256 = vld [vmem:[#allocation8 + $0x260] sm:$0xff]
    %v257 = vld [vmem:[#allocation8 + $0x268] sm:$0xff]
    %v258 = vld [vmem:[#allocation8 + $0x270] sm:$0xff]
    %v259 = vld [vmem:[#allocation8 + $0x278] sm:$0xff]
    %v260 = vld [vmem:[#allocation8 + $0x280] sm:$0xff]
    %v261 = vld [vmem:[#allocation8 + $0x288] sm:$0xff]
    %v262 = vld [vmem:[#allocation8 + $0x290] sm:$0xff]
    %v263 = vld [vmem:[#allocation8 + $0x298] sm:$0xff]
    %v264 = vld [vmem:[#allocation8 + $0x2a0] sm:$0xff]
    %v265 = vld [vmem:[#allocation8 + $0x2a8] sm:$0xff]
    %v266 = vld [vmem:[#allocation8 + $0x2b0] sm:$0xff]
    %v267 = vld [vmem:[#allocation8 + $0x2b8] sm:$0xff]
    %v268 = vld [vmem:[#allocation8 + $0x2c0] sm:$0xff]
    %v269 = vld [vmem:[#allocation8 + $0x2c8] sm:$0xff]
    %v270 = vld [vmem:[#allocation8 + $0x2d0] sm:$0xff]
    %v271 = vld [vmem:[#allocation8 + $0x2d8] sm:$0xff]
    %v272 = vld [vmem:[#allocation8 + $0x2e0] sm:$0xff]
    %v273 = vld [vmem:[#allocation8 + $0x2e8] sm:$0xff]
    %v274 = vld [vmem:[#allocation8 + $0x2f0] sm:$0xff]
    %v275 = vld [vmem:[#allocation8 + $0x2f8] sm:$0xff]
    %v276 = vld [vmem:[#allocation8 + $0x300] sm:$0xff]
    %v277 = vld [vmem:[#allocation8 + $0x308] sm:$0xff]
    %v278 = vld [vmem:[#allocation8 + $0x310] sm:$0xff]
    %v279 = vld [vmem:[#allocation8 + $0x318] sm:$0xff]
    %v280 = vld [vmem:[#allocation8 + $0x320] sm:$0xff]
    %v281 = vld [vmem:[#allocation8 + $0x328] sm:$0xff]
    %v282 = vld [vmem:[#allocation8 + $0x330] sm:$0xff]
    %v283 = vld [vmem:[#allocation8 + $0x338] sm:$0xff]
    %v284 = vld [vmem:[#allocation8 + $0x340] sm:$0xff]
    %v285 = vld [vmem:[#allocation8 + $0x348] sm:$0xff]
    %v286 = vld [vmem:[#allocation8 + $0x350] sm:$0xff]
    %v287 = vld [vmem:[#allocation8 + $0x358] sm:$0xff]
    %v288 = vld [vmem:[#allocation8 + $0x360] sm:$0xff]
    %v289 = vld [vmem:[#allocation8 + $0x368] sm:$0xff]
    %v290 = vld [vmem:[#allocation8 + $0x370] sm:$0xff]
    %v291 = vld [vmem:[#allocation8 + $0x378] sm:$0xff]
    %v292 = vld [vmem:[#allocation8 + $0x380] sm:$0xff]
    %v293 = vld [vmem:[#allocation8 + $0x388] sm:$0xff]
    %v294 = vld [vmem:[#allocation8 + $0x390] sm:$0xff]
    %v295 = vld [vmem:[#allocation8 + $0x398] sm:$0xff]
    %v296 = vld [vmem:[#allocation8 + $0x3a0] sm:$0xff]
    %v297 = vld [vmem:[#allocation8 + $0x3a8] sm:$0xff]
    %v298 = vld [vmem:[#allocation8 + $0x3b0] sm:$0xff]
    %v299 = vld [vmem:[#allocation8 + $0x3b8] sm:$0xff]
    %v300 = vld [vmem:[#allocation8 + $0x3c0] sm:$0xff]
    %v301 = vld [vmem:[#allocation8 + $0x3c8] sm:$0xff]
    %v302 = vld [vmem:[#allocation8 + $0x3d0] sm:$0xff]
    %v303 = vld [vmem:[#allocation8 + $0x3d8] sm:$0xff]
    %v304 = vld [vmem:[#allocation8 + $0x3e0] sm:$0xff]
    %v305 = vld [vmem:[#allocation8 + $0x3e8] sm:$0xff]
    %v306 = vld [vmem:[#allocation8 + $0x3f0] sm:$0xff]
    %v307 = vld [vmem:[#allocation8 + $0x3f8] sm:$0xff]
    %v308 = vld [vmem:[#allocation8 + $0x400] sm:$0xff]
    %v309 = vld [vmem:[#allocation8 + $0x408] sm:$0xff]
    %v310 = vld [vmem:[#allocation8 + $0x410] sm:$0xff]
    %v311 = vld [vmem:[#allocation8 + $0x418] sm:$0xff]
    %v312 = vld [vmem:[#allocation8 + $0x420] sm:$0xff]
    %v313 = vld [vmem:[#allocation8 + $0x428] sm:$0xff]
    %v314 = vld [vmem:[#allocation8 + $0x430] sm:$0xff]
    %v315 = vld [vmem:[#allocation8 + $0x438] sm:$0xff]
    %v316 = vld [vmem:[#allocation8 + $0x440] sm:$0xff]
    %v317 = vld [vmem:[#allocation8 + $0x448] sm:$0xff]
    %v318 = vld [vmem:[#allocation8 + $0x450] sm:$0xff]
    %v319 = vld [vmem:[#allocation8 + $0x458] sm:$0xff]
    %v320 = vld [vmem:[#allocation8 + $0x460] sm:$0xff]
    %v321 = vld [vmem:[#allocation8 + $0x468] sm:$0xff]
    %v322 = vld [vmem:[#allocation8 + $0x470] sm:$0xff]
    %v323 = vld [vmem:[#allocation8 + $0x478] sm:$0xff]
    %v324 = vld [vmem:[#allocation8 + $0x480] sm:$0xff]
    %v325 = vld [vmem:[#allocation8 + $0x488] sm:$0xff]
    %v326 = vld [vmem:[#allocation8 + $0x490] sm:$0xff]
    %v327 = vld [vmem:[#allocation8 + $0x498] sm:$0xff]
    %v328 = vld [vmem:[#allocation8 + $0x4a0] sm:$0xff]
    %v329 = vld [vmem:[#allocation8 + $0x4a8] sm:$0xff]
    %v330 = vld [vmem:[#allocation8 + $0x4b0] sm:$0xff]
    %v331 = vld [vmem:[#allocation8 + $0x4b8] sm:$0xff]
    %v332 = vld [vmem:[#allocation8 + $0x4c0] sm:$0xff]
    %v333 = vld [vmem:[#allocation8 + $0x4c8] sm:$0xff]
    %v334 = vld [vmem:[#allocation8 + $0x4d0] sm:$0xff]
    %v335 = vld [vmem:[#allocation8 + $0x4d8] sm:$0xff]
    %v336 = vld [vmem:[#allocation8 + $0x4e0] sm:$0xff]
    %v337 = vld [vmem:[#allocation8 + $0x4e8] sm:$0xff]
    %v338 = vld [vmem:[#allocation8 + $0x4f0] sm:$0xff]
    %v339 = vld [vmem:[#allocation8 + $0x4f8] sm:$0xff]
    %v340 = vld [vmem:[#allocation8 + $0x500] sm:$0xff]
    %v341 = vld [vmem:[#allocation8 + $0x508] sm:$0xff]
    %v342 = vld [vmem:[#allocation8 + $0x510] sm:$0xff]
    %v343 = vld [vmem:[#allocation8 + $0x518] sm:$0xff]
    %v344 = vld [vmem:[#allocation8 + $0x520] sm:$0xff]
    %v345 = vld [vmem:[#allocation8 + $0x528] sm:$0xff]
    %v346 = vld [vmem:[#allocation8 + $0x530] sm:$0xff]
    %v347 = vld [vmem:[#allocation8 + $0x538] sm:$0xff]
    %v348 = vld [vmem:[#allocation8 + $0x540] sm:$0xff]
    %v349 = vld [vmem:[#allocation8 + $0x548] sm:$0xff]
    %v350 = vld [vmem:[#allocation8 + $0x550] sm:$0xff]
    %v351 = vld [vmem:[#allocation8 + $0x558] sm:$0xff]
    %v352 = vld [vmem:[#allocation8 + $0x560] sm:$0xff]
    %v353 = vld [vmem:[#allocation8 + $0x568] sm:$0xff]
    %v354 = vld [vmem:[#allocation8 + $0x570] sm:$0xff]
    %v355 = vld [vmem:[#allocation8 + $0x578] sm:$0xff]
    %v356 = vld [vmem:[#allocation8 + $0x580] sm:$0xff]
    %v357 = vld [vmem:[#allocation8 + $0x588] sm:$0xff]
    %v358 = vld [vmem:[#allocation8 + $0x590] sm:$0xff]
    %v359 = vld [vmem:[#allocation8 + $0x598] sm:$0xff]
    %v360 = vld [vmem:[#allocation8 + $0x5a0] sm:$0xff]
    %v361 = vld [vmem:[#allocation8 + $0x5a8] sm:$0xff]
    %v362 = vld [vmem:[#allocation8 + $0x5b0] sm:$0xff]
    %v363 = vld [vmem:[#allocation8 + $0x5b8] sm:$0xff]
    %v364 = vld [vmem:[#allocation8 + $0x5c0] sm:$0xff]
    %v365 = vld [vmem:[#allocation8 + $0x5c8] sm:$0xff]
    %v366 = vld [vmem:[#allocation8 + $0x5d0] sm:$0xff]
    %v367 = vld [vmem:[#allocation8 + $0x5d8] sm:$0xff]
    %v368 = vld [vmem:[#allocation8 + $0x5e0] sm:$0xff]
    %v369 = vld [vmem:[#allocation8 + $0x5e8] sm:$0xff]
    %v370 = vld [vmem:[#allocation8 + $0x5f0] sm:$0xff]
    %v371 = vld [vmem:[#allocation8 + $0x5f8] sm:$0xff]
    %v372 = vld [vmem:[#allocation8 + $0x600] sm:$0xff]
    %v373 = vld [vmem:[#allocation8 + $0x608] sm:$0xff]
    %v374 = vld [vmem:[#allocation8 + $0x610] sm:$0xff]
    %v375 = vld [vmem:[#allocation8 + $0x618] sm:$0xff]
    %v376 = vld [vmem:[#allocation10] sm:$0xf]
    %v378 = vperm.slane %v376, 0
    %v379 = vperm.slane %v376, 1
    %v380 = vperm.slane %v376, 2
    %v381 = vperm.slane %v376, 3
    %v582 = vunpack.c.l.b16 %v180
    %v583 = vunpack.c.h.b16 %v180
    %v584 = vunpack.c.l.b16 %v181
    %v585 = vunpack.c.h.b16 %v181
    %v586 = vunpack.c.l.b16 %v182
    %v587 = vunpack.c.h.b16 %v182
    %v588 = vunpack.c.l.b16 %v183
    %v589 = vunpack.c.h.b16 %v183
    %v590 = vunpack.c.l.b16 %v184
    %v591 = vunpack.c.h.b16 %v184
    %v592 = vunpack.c.l.b16 %v185
    %v593 = vunpack.c.h.b16 %v185
    %v594 = vunpack.c.l.b16 %v186
    %v595 = vunpack.c.h.b16 %v186
    %v596 = vunpack.c.l.b16 %v187
    %v597 = vunpack.c.h.b16 %v187
    %v598 = vunpack.c.l.b16 %v188
    %v599 = vunpack.c.h.b16 %v188
    %v600 = vunpack.c.l.b16 %v189
    %v601 = vunpack.c.h.b16 %v189
    %v602 = vunpack.c.l.b16 %v190
    %v603 = vunpack.c.h.b16 %v190
    %v604 = vunpack.c.l.b16 %v191
    %v605 = vunpack.c.h.b16 %v191
    %v606 = vunpack.c.l.b16 %v192
    %v607 = vunpack.c.h.b16 %v192
    %v608 = vunpack.c.l.b16 %v193
    %v609 = vunpack.c.h.b16 %v193
    %v610 = vunpack.c.l.b16 %v194
    %v611 = vunpack.c.h.b16 %v194
    %v612 = vunpack.c.l.b16 %v195
    %v613 = vunpack.c.h.b16 %v195
    %v614 = vunpack.c.l.b16 %v196
    %v615 = vunpack.c.h.b16 %v196
    %v616 = vunpack.c.l.b16 %v197
    %v617 = vunpack.c.h.b16 %v197
    %v618 = vunpack.c.l.b16 %v198
    %v619 = vunpack.c.h.b16 %v198
    %v620 = vunpack.c.l.b16 %v199
    %v621 = vunpack.c.h.b16 %v199
    %v622 = vunpack.c.l.b16 %v200
    %v623 = vunpack.c.h.b16 %v200
    %v624 = vunpack.c.l.b16 %v201
    %v625 = vunpack.c.h.b16 %v201
    %v626 = vunpack.c.l.b16 %v202
    %v627 = vunpack.c.h.b16 %v202
    %v628 = vunpack.c.l.b16 %v203
    %v629 = vunpack.c.h.b16 %v203
    %v630 = vunpack.c.l.b16 %v204
    %v631 = vunpack.c.h.b16 %v204
    %v632 = vunpack.c.l.b16 %v205
    %v633 = vunpack.c.h.b16 %v205
    %v634 = vunpack.c.l.b16 %v206
    %v635 = vunpack.c.h.b16 %v206
    %v636 = vunpack.c.l.b16 %v207
    %v637 = vunpack.c.h.b16 %v207
    %v638 = vunpack.c.l.b16 %v208
    %v639 = vunpack.c.h.b16 %v208
    %v640 = vunpack.c.l.b16 %v209
    %v641 = vunpack.c.h.b16 %v209
    %v642 = vunpack.c.l.b16 %v210
    %v643 = vunpack.c.h.b16 %v210
    %v644 = vunpack.c.l.b16 %v211
    %v645 = vunpack.c.h.b16 %v211
    %v646 = vunpack.c.l.b16 %v212
    %v647 = vunpack.c.h.b16 %v212
    %v648 = vunpack.c.l.b16 %v213
    %v649 = vunpack.c.h.b16 %v213
    %v650 = vunpack.c.l.b16 %v214
    %v651 = vunpack.c.h.b16 %v214
    %v652 = vunpack.c.l.b16 %v215
    %v653 = vunpack.c.h.b16 %v215
    %v654 = vunpack.c.l.b16 %v216
    %v655 = vunpack.c.h.b16 %v216
    %v656 = vunpack.c.l.b16 %v217
    %v657 = vunpack.c.h.b16 %v217
    %v658 = vunpack.c.l.b16 %v218
    %v659 = vunpack.c.h.b16 %v218
    %v660 = vunpack.c.l.b16 %v219
    %v661 = vunpack.c.h.b16 %v219
    %v662 = vunpack.c.l.b16 %v220
    %v663 = vunpack.c.h.b16 %v220
    %v664 = vunpack.c.l.b16 %v221
    %v665 = vunpack.c.h.b16 %v221
    %v666 = vunpack.c.l.b16 %v222
    %v667 = vunpack.c.h.b16 %v222
    %v668 = vunpack.c.l.b16 %v223
    %v669 = vunpack.c.h.b16 %v223
    %v670 = vunpack.c.l.b16 %v224
    %v671 = vunpack.c.h.b16 %v224
    %v672 = vunpack.c.l.b16 %v225
    %v673 = vunpack.c.h.b16 %v225
    %v674 = vunpack.c.l.b16 %v226
    %v675 = vunpack.c.h.b16 %v226
    %v676 = vunpack.c.l.b16 %v227
    %v677 = vunpack.c.h.b16 %v227
    %v678 = vunpack.c.l.b16 %v228
    %v679 = vunpack.c.h.b16 %v228
    %v680 = vunpack.c.l.b16 %v229
    %v681 = vunpack.c.h.b16 %v229
    %v682 = vunpack.c.l.b16 %v230
    %v683 = vunpack.c.h.b16 %v230
    %v684 = vunpack.c.l.b16 %v231
    %v685 = vunpack.c.h.b16 %v231
    %v686 = vunpack.c.l.b16 %v232
    %v687 = vunpack.c.h.b16 %v232
    %v688 = vunpack.c.l.b16 %v233
    %v689 = vunpack.c.h.b16 %v233
    %v690 = vunpack.c.l.b16 %v234
    %v691 = vunpack.c.h.b16 %v234
    %v692 = vunpack.c.l.b16 %v235
    %v693 = vunpack.c.h.b16 %v235
    %v694 = vunpack.c.l.b16 %v236
    %v695 = vunpack.c.h.b16 %v236
    %v696 = vunpack.c.l.b16 %v237
    %v697 = vunpack.c.h.b16 %v237
    %v698 = vunpack.c.l.b16 %v238
    %v699 = vunpack.c.h.b16 %v238
    %v700 = vunpack.c.l.b16 %v239
    %v701 = vunpack.c.h.b16 %v239
    %v702 = vunpack.c.l.b16 %v240
    %v703 = vunpack.c.h.b16 %v240
    %v704 = vunpack.c.l.b16 %v241
    %v705 = vunpack.c.h.b16 %v241
    %v706 = vunpack.c.l.b16 %v242
    %v707 = vunpack.c.h.b16 %v242
    %v708 = vunpack.c.l.b16 %v243
    %v709 = vunpack.c.h.b16 %v243
    %v710 = vunpack.c.l.b16 %v244
    %v711 = vunpack.c.h.b16 %v244
    %v712 = vunpack.c.l.b16 %v245
    %v713 = vunpack.c.h.b16 %v245
    %v714 = vunpack.c.l.b16 %v246
    %v715 = vunpack.c.h.b16 %v246
    %v716 = vunpack.c.l.b16 %v247
    %v717 = vunpack.c.h.b16 %v247
    %v718 = vunpack.c.l.b16 %v248
    %v719 = vunpack.c.h.b16 %v248
    %v720 = vunpack.c.l.b16 %v249
    %v721 = vunpack.c.h.b16 %v249
    %v722 = vunpack.c.l.b16 %v250
    %v723 = vunpack.c.h.b16 %v250
    %v724 = vunpack.c.l.b16 %v251
    %v725 = vunpack.c.h.b16 %v251
    %v726 = vunpack.c.l.b16 %v252
    %v727 = vunpack.c.h.b16 %v252
    %v728 = vunpack.c.l.b16 %v253
    %v729 = vunpack.c.h.b16 %v253
    %v730 = vunpack.c.l.b16 %v254
    %v731 = vunpack.c.h.b16 %v254
    %v732 = vunpack.c.l.b16 %v255
    %v733 = vunpack.c.h.b16 %v255
    %v734 = vunpack.c.l.b16 %v256
    %v735 = vunpack.c.h.b16 %v256
    %v736 = vunpack.c.l.b16 %v257
    %v737 = vunpack.c.h.b16 %v257
    %v738 = vunpack.c.l.b16 %v258
    %v739 = vunpack.c.h.b16 %v258
    %v740 = vunpack.c.l.b16 %v259
    %v741 = vunpack.c.h.b16 %v259
    %v742 = vunpack.c.l.b16 %v260
    %v743 = vunpack.c.h.b16 %v260
    %v744 = vunpack.c.l.b16 %v261
    %v745 = vunpack.c.h.b16 %v261
    %v746 = vunpack.c.l.b16 %v262
    %v747 = vunpack.c.h.b16 %v262
    %v748 = vunpack.c.l.b16 %v263
    %v749 = vunpack.c.h.b16 %v263
    %v750 = vunpack.c.l.b16 %v264
    %v751 = vunpack.c.h.b16 %v264
    %v752 = vunpack.c.l.b16 %v265
    %v753 = vunpack.c.h.b16 %v265
    %v754 = vunpack.c.l.b16 %v266
    %v755 = vunpack.c.h.b16 %v266
    %v756 = vunpack.c.l.b16 %v267
    %v757 = vunpack.c.h.b16 %v267
    %v758 = vunpack.c.l.b16 %v268
    %v759 = vunpack.c.h.b16 %v268
    %v760 = vunpack.c.l.b16 %v269
    %v761 = vunpack.c.h.b16 %v269
    %v762 = vunpack.c.l.b16 %v270
    %v763 = vunpack.c.h.b16 %v270
    %v764 = vunpack.c.l.b16 %v271
    %v765 = vunpack.c.h.b16 %v271
    %v766 = vunpack.c.l.b16 %v272
    %v767 = vunpack.c.h.b16 %v272
    %v768 = vunpack.c.l.b16 %v273
    %v769 = vunpack.c.h.b16 %v273
    %v770 = vunpack.c.l.b16 %v274
    %v771 = vunpack.c.h.b16 %v274
    %v772 = vunpack.c.l.b16 %v275
    %v773 = vunpack.c.h.b16 %v275
    %v774 = vunpack.c.l.b16 %v276
    %v775 = vunpack.c.h.b16 %v276
    %v776 = vunpack.c.l.b16 %v277
    %v777 = vunpack.c.h.b16 %v277
    %v778 = vunpack.c.l.b16 %v278
    %v779 = vunpack.c.h.b16 %v278
    %v780 = vunpack.c.l.b16 %v279
    %v781 = vunpack.c.h.b16 %v279
    %v782 = vunpack.c.l.b16 %v280
    %v783 = vunpack.c.h.b16 %v280
    %v784 = vunpack.c.l.b16 %v281
    %v785 = vunpack.c.h.b16 %v281
    %v786 = vunpack.c.l.b16 %v282
    %v787 = vunpack.c.h.b16 %v282
    %v788 = vunpack.c.l.b16 %v283
    %v789 = vunpack.c.h.b16 %v283
    %v790 = vunpack.c.l.b16 %v284
    %v791 = vunpack.c.h.b16 %v284
    %v792 = vunpack.c.l.b16 %v285
    %v793 = vunpack.c.h.b16 %v285
    %v794 = vunpack.c.l.b16 %v286
    %v795 = vunpack.c.h.b16 %v286
    %v796 = vunpack.c.l.b16 %v287
    %v797 = vunpack.c.h.b16 %v287
    %v798 = vunpack.c.l.b16 %v288
    %v799 = vunpack.c.h.b16 %v288
    %v800 = vunpack.c.l.b16 %v289
    %v801 = vunpack.c.h.b16 %v289
    %v802 = vunpack.c.l.b16 %v290
    %v803 = vunpack.c.h.b16 %v290
    %v804 = vunpack.c.l.b16 %v291
    %v805 = vunpack.c.h.b16 %v291
    %v806 = vunpack.c.l.b16 %v292
    %v807 = vunpack.c.h.b16 %v292
    %v808 = vunpack.c.l.b16 %v293
    %v809 = vunpack.c.h.b16 %v293
    %v810 = vunpack.c.l.b16 %v294
    %v811 = vunpack.c.h.b16 %v294
    %v812 = vunpack.c.l.b16 %v295
    %v813 = vunpack.c.h.b16 %v295
    %v814 = vunpack.c.l.b16 %v296
    %v815 = vunpack.c.h.b16 %v296
    %v816 = vunpack.c.l.b16 %v297
    %v817 = vunpack.c.h.b16 %v297
    %v818 = vunpack.c.l.b16 %v298
    %v819 = vunpack.c.h.b16 %v298
    %v820 = vunpack.c.l.b16 %v299
    %v821 = vunpack.c.h.b16 %v299
    %v822 = vunpack.c.l.b16 %v300
    %v823 = vunpack.c.h.b16 %v300
    %v824 = vunpack.c.l.b16 %v301
    %v825 = vunpack.c.h.b16 %v301
    %v826 = vunpack.c.l.b16 %v302
    %v827 = vunpack.c.h.b16 %v302
    %v828 = vunpack.c.l.b16 %v303
    %v829 = vunpack.c.h.b16 %v303
    %v830 = vunpack.c.l.b16 %v304
    %v831 = vunpack.c.h.b16 %v304
    %v832 = vunpack.c.l.b16 %v305
    %v833 = vunpack.c.h.b16 %v305
    %v834 = vunpack.c.l.b16 %v306
    %v835 = vunpack.c.h.b16 %v306
    %v836 = vunpack.c.l.b16 %v307
    %v837 = vunpack.c.h.b16 %v307
    %v838 = vunpack.c.l.b16 %v308
    %v839 = vunpack.c.h.b16 %v308
    %v840 = vunpack.c.l.b16 %v309
    %v841 = vunpack.c.h.b16 %v309
    %v842 = vunpack.c.l.b16 %v310
    %v843 = vunpack.c.h.b16 %v310
    %v844 = vunpack.c.l.b16 %v311
    %v845 = vunpack.c.h.b16 %v311
    %v846 = vunpack.c.l.b16 %v312
    %v847 = vunpack.c.h.b16 %v312
    %v848 = vunpack.c.l.b16 %v313
    %v849 = vunpack.c.h.b16 %v313
    %v850 = vunpack.c.l.b16 %v314
    %v851 = vunpack.c.h.b16 %v314
    %v852 = vunpack.c.l.b16 %v315
    %v853 = vunpack.c.h.b16 %v315
    %v854 = vunpack.c.l.b16 %v316
    %v855 = vunpack.c.h.b16 %v316
    %v856 = vunpack.c.l.b16 %v317
    %v857 = vunpack.c.h.b16 %v317
    %v858 = vunpack.c.l.b16 %v318
    %v859 = vunpack.c.h.b16 %v318
    %v860 = vunpack.c.l.b16 %v319
    %v861 = vunpack.c.h.b16 %v319
    %v862 = vunpack.c.l.b16 %v320
    %v863 = vunpack.c.h.b16 %v320
    %v864 = vunpack.c.l.b16 %v321
    %v865 = vunpack.c.h.b16 %v321
    %v866 = vunpack.c.l.b16 %v322
    %v867 = vunpack.c.h.b16 %v322
    %v868 = vunpack.c.l.b16 %v323
    %v869 = vunpack.c.h.b16 %v323
    %v870 = vunpack.c.l.b16 %v324
    %v871 = vunpack.c.h.b16 %v324
    %v872 = vunpack.c.l.b16 %v325
    %v873 = vunpack.c.h.b16 %v325
    %v874 = vunpack.c.l.b16 %v326
    %v875 = vunpack.c.h.b16 %v326
    %v876 = vunpack.c.l.b16 %v327
    %v877 = vunpack.c.h.b16 %v327
    %v878 = vunpack.c.l.b16 %v328
    %v879 = vunpack.c.h.b16 %v328
    %v880 = vunpack.c.l.b16 %v329
    %v881 = vunpack.c.h.b16 %v329
    %v882 = vunpack.c.l.b16 %v330
    %v883 = vunpack.c.h.b16 %v330
    %v884 = vunpack.c.l.b16 %v331
    %v885 = vunpack.c.h.b16 %v331
    %v886 = vunpack.c.l.b16 %v332
    %v887 = vunpack.c.h.b16 %v332
    %v888 = vunpack.c.l.b16 %v333
    %v889 = vunpack.c.h.b16 %v333
    %v890 = vunpack.c.l.b16 %v334
    %v891 = vunpack.c.h.b16 %v334
    %v892 = vunpack.c.l.b16 %v335
    %v893 = vunpack.c.h.b16 %v335
    %v894 = vunpack.c.l.b16 %v336
    %v895 = vunpack.c.h.b16 %v336
    %v896 = vunpack.c.l.b16 %v337
    %v897 = vunpack.c.h.b16 %v337
    %v898 = vunpack.c.l.b16 %v338
    %v899 = vunpack.c.h.b16 %v338
    %v900 = vunpack.c.l.b16 %v339
    %v901 = vunpack.c.h.b16 %v339
    %v902 = vunpack.c.l.b16 %v340
    %v903 = vunpack.c.h.b16 %v340
    %v904 = vunpack.c.l.b16 %v341
    %v905 = vunpack.c.h.b16 %v341
    %v906 = vunpack.c.l.b16 %v342
    %v907 = vunpack.c.h.b16 %v342
    %v908 = vunpack.c.l.b16 %v343
    %v909 = vunpack.c.h.b16 %v343
    %v910 = vunpack.c.l.b16 %v344
    %v911 = vunpack.c.h.b16 %v344
    %v912 = vunpack.c.l.b16 %v345
    %v913 = vunpack.c.h.b16 %v345
    %v914 = vunpack.c.l.b16 %v346
    %v915 = vunpack.c.h.b16 %v346
    %v916 = vunpack.c.l.b16 %v347
    %v917 = vunpack.c.h.b16 %v347
    %v918 = vunpack.c.l.b16 %v348
    %v919 = vunpack.c.h.b16 %v348
    %v920 = vunpack.c.l.b16 %v349
    %v921 = vunpack.c.h.b16 %v349
    %v922 = vunpack.c.l.b16 %v350
    %v923 = vunpack.c.h.b16 %v350
    %v924 = vunpack.c.l.b16 %v351
    %v925 = vunpack.c.h.b16 %v351
    %v926 = vunpack.c.l.b16 %v352
    %v927 = vunpack.c.h.b16 %v352
    %v928 = vunpack.c.l.b16 %v353
    %v929 = vunpack.c.h.b16 %v353
    %v930 = vunpack.c.l.b16 %v354
    %v931 = vunpack.c.h.b16 %v354
    %v932 = vunpack.c.l.b16 %v355
    %v933 = vunpack.c.h.b16 %v355
    %v934 = vunpack.c.l.b16 %v356
    %v935 = vunpack.c.h.b16 %v356
    %v936 = vunpack.c.l.b16 %v357
    %v937 = vunpack.c.h.b16 %v357
    %v938 = vunpack.c.l.b16 %v358
    %v939 = vunpack.c.h.b16 %v358
    %v940 = vunpack.c.l.b16 %v359
    %v941 = vunpack.c.h.b16 %v359
    %v942 = vunpack.c.l.b16 %v360
    %v943 = vunpack.c.h.b16 %v360
    %v944 = vunpack.c.l.b16 %v361
    %v945 = vunpack.c.h.b16 %v361
    %v946 = vunpack.c.l.b16 %v362
    %v947 = vunpack.c.h.b16 %v362
    %v948 = vunpack.c.l.b16 %v363
    %v949 = vunpack.c.h.b16 %v363
    %v950 = vunpack.c.l.b16 %v364
    %v951 = vunpack.c.h.b16 %v364
    %v952 = vunpack.c.l.b16 %v365
    %v953 = vunpack.c.h.b16 %v365
    %v954 = vunpack.c.l.b16 %v366
    %v955 = vunpack.c.h.b16 %v366
    %v956 = vunpack.c.l.b16 %v367
    %v957 = vunpack.c.h.b16 %v367
    %v958 = vunpack.c.l.b16 %v368
    %v959 = vunpack.c.h.b16 %v368
    %v960 = vunpack.c.l.b16 %v369
    %v961 = vunpack.c.h.b16 %v369
    %v962 = vunpack.c.l.b16 %v370
    %v963 = vunpack.c.h.b16 %v370
    %v964 = vunpack.c.l.b16 %v371
    %v965 = vunpack.c.h.b16 %v371
    %v966 = vunpack.c.l.b16 %v372
    %v967 = vunpack.c.h.b16 %v372
    %v968 = vunpack.c.l.b16 %v373
    %v969 = vunpack.c.h.b16 %v373
    %v970 = vunpack.c.l.b16 %v374
    %v971 = vunpack.c.h.b16 %v374
    %v972 = vunpack.c.l.b16 %v375
    %v973 = vunpack.c.h.b16 %v375
    %v974 = vpack.c.b16 %v586, %v582
    %v975 = vpack.c.b16 %v587, %v583
    %v976 = vpack.c.b16 %v588, %v584
    %v977 = vpack.c.b16 %v589, %v585
    %v978 = vpack.c.b16 %v594, %v590
    %v979 = vpack.c.b16 %v595, %v591
    %v980 = vpack.c.b16 %v596, %v592
    %v981 = vpack.c.b16 %v597, %v593
    %v982 = vpack.c.b16 %v602, %v598
    %v983 = vpack.c.b16 %v603, %v599
    %v984 = vpack.c.b16 %v604, %v600
    %v985 = vpack.c.b16 %v605, %v601
    %v986 = vpack.c.b16 %v610, %v606
    %v987 = vpack.c.b16 %v611, %v607
    %v988 = vpack.c.b16 %v612, %v608
    %v989 = vpack.c.b16 %v613, %v609
    %v990 = vpack.c.b16 %v618, %v614
    %v991 = vpack.c.b16 %v619, %v615
    %v992 = vpack.c.b16 %v620, %v616
    %v993 = vpack.c.b16 %v621, %v617
    %v994 = vpack.c.b16 %v626, %v622
    %v995 = vpack.c.b16 %v627, %v623
    %v996 = vpack.c.b16 %v628, %v624
    %v997 = vpack.c.b16 %v629, %v625
    %v998 = vpack.c.b16 %v634, %v630
    %v999 = vpack.c.b16 %v635, %v631
    %v1000 = vpack.c.b16 %v636, %v632
    %v1001 = vpack.c.b16 %v637, %v633
    %v1002 = vpack.c.b16 %v642, %v638
    %v1003 = vpack.c.b16 %v643, %v639
    %v1004 = vpack.c.b16 %v644, %v640
    %v1005 = vpack.c.b16 %v645, %v641
    %v1006 = vpack.c.b16 %v650, %v646
    %v1007 = vpack.c.b16 %v651, %v647
    %v1008 = vpack.c.b16 %v652, %v648
    %v1009 = vpack.c.b16 %v653, %v649
    %v1010 = vpack.c.b16 %v658, %v654
    %v1011 = vpack.c.b16 %v659, %v655
    %v1012 = vpack.c.b16 %v660, %v656
    %v1013 = vpack.c.b16 %v661, %v657
    %v1014 = vpack.c.b16 %v666, %v662
    %v1015 = vpack.c.b16 %v667, %v663
    %v1016 = vpack.c.b16 %v668, %v664
    %v1017 = vpack.c.b16 %v669, %v665
    %v1018 = vpack.c.b16 %v674, %v670
    %v1019 = vpack.c.b16 %v675, %v671
    %v1020 = vpack.c.b16 %v676, %v672
    %v1021 = vpack.c.b16 %v677, %v673
    %v1022 = vpack.c.b16 %v682, %v678
    %v1023 = vpack.c.b16 %v683, %v679
    %v1024 = vpack.c.b16 %v684, %v680
    %v1025 = vpack.c.b16 %v685, %v681
    %v1026 = vpack.c.b16 %v690, %v686
    %v1027 = vpack.c.b16 %v691, %v687
    %v1028 = vpack.c.b16 %v692, %v688
    %v1029 = vpack.c.b16 %v693, %v689
    %v1030 = vpack.c.b16 %v698, %v694
    %v1031 = vpack.c.b16 %v699, %v695
    %v1032 = vpack.c.b16 %v700, %v696
    %v1033 = vpack.c.b16 %v701, %v697
    %v1034 = vpack.c.b16 %v706, %v702
    %v1035 = vpack.c.b16 %v707, %v703
    %v1036 = vpack.c.b16 %v708, %v704
    %v1037 = vpack.c.b16 %v709, %v705
    %v1038 = vpack.c.b16 %v714, %v710
    %v1039 = vpack.c.b16 %v715, %v711
    %v1040 = vpack.c.b16 %v716, %v712
    %v1041 = vpack.c.b16 %v717, %v713
    %v1042 = vpack.c.b16 %v722, %v718
    %v1043 = vpack.c.b16 %v723, %v719
    %v1044 = vpack.c.b16 %v724, %v720
    %v1045 = vpack.c.b16 %v725, %v721
    %v1046 = vpack.c.b16 %v730, %v726
    %v1047 = vpack.c.b16 %v731, %v727
    %v1048 = vpack.c.b16 %v732, %v728
    %v1049 = vpack.c.b16 %v733, %v729
    %v1050 = vpack.c.b16 %v738, %v734
    %v1051 = vpack.c.b16 %v739, %v735
    %v1052 = vpack.c.b16 %v740, %v736
    %v1053 = vpack.c.b16 %v741, %v737
    %v1054 = vpack.c.b16 %v746, %v742
    %v1055 = vpack.c.b16 %v747, %v743
    %v1056 = vpack.c.b16 %v748, %v744
    %v1057 = vpack.c.b16 %v749, %v745
    %v1058 = vpack.c.b16 %v754, %v750
    %v1059 = vpack.c.b16 %v755, %v751
    %v1060 = vpack.c.b16 %v756, %v752
    %v1061 = vpack.c.b16 %v757, %v753
    %v1062 = vpack.c.b16 %v762, %v758
    %v1063 = vpack.c.b16 %v763, %v759
    %v1064 = vpack.c.b16 %v764, %v760
    %v1065 = vpack.c.b16 %v765, %v761
    %v1066 = vpack.c.b16 %v770, %v766
    %v1067 = vpack.c.b16 %v771, %v767
    %v1068 = vpack.c.b16 %v772, %v768
    %v1069 = vpack.c.b16 %v773, %v769
    %v1070 = vpack.c.b16 %v778, %v774
    %v1071 = vpack.c.b16 %v779, %v775
    %v1072 = vpack.c.b16 %v780, %v776
    %v1073 = vpack.c.b16 %v781, %v777
    %v1074 = vpack.c.b16 %v786, %v782
    %v1075 = vpack.c.b16 %v787, %v783
    %v1076 = vpack.c.b16 %v788, %v784
    %v1077 = vpack.c.b16 %v789, %v785
    %v1078 = vpack.c.b16 %v794, %v790
    %v1079 = vpack.c.b16 %v795, %v791
    %v1080 = vpack.c.b16 %v796, %v792
    %v1081 = vpack.c.b16 %v797, %v793
    %v1082 = vpack.c.b16 %v802, %v798
    %v1083 = vpack.c.b16 %v803, %v799
    %v1084 = vpack.c.b16 %v804, %v800
    %v1085 = vpack.c.b16 %v805, %v801
    %v1086 = vpack.c.b16 %v810, %v806
    %v1087 = vpack.c.b16 %v811, %v807
    %v1088 = vpack.c.b16 %v812, %v808
    %v1089 = vpack.c.b16 %v813, %v809
    %v1090 = vpack.c.b16 %v818, %v814
    %v1091 = vpack.c.b16 %v819, %v815
    %v1092 = vpack.c.b16 %v820, %v816
    %v1093 = vpack.c.b16 %v821, %v817
    %v1094 = vpack.c.b16 %v826, %v822
    %v1095 = vpack.c.b16 %v827, %v823
    %v1096 = vpack.c.b16 %v828, %v824
    %v1097 = vpack.c.b16 %v829, %v825
    %v1098 = vpack.c.b16 %v834, %v830
    %v1099 = vpack.c.b16 %v835, %v831
    %v1100 = vpack.c.b16 %v836, %v832
    %v1101 = vpack.c.b16 %v837, %v833
    %v1102 = vpack.c.b16 %v842, %v838
    %v1103 = vpack.c.b16 %v843, %v839
    %v1104 = vpack.c.b16 %v844, %v840
    %v1105 = vpack.c.b16 %v845, %v841
    %v1106 = vpack.c.b16 %v850, %v846
    %v1107 = vpack.c.b16 %v851, %v847
    %v1108 = vpack.c.b16 %v852, %v848
    %v1109 = vpack.c.b16 %v853, %v849
    %v1110 = vpack.c.b16 %v858, %v854
    %v1111 = vpack.c.b16 %v859, %v855
    %v1112 = vpack.c.b16 %v860, %v856
    %v1113 = vpack.c.b16 %v861, %v857
    %v1114 = vpack.c.b16 %v866, %v862
    %v1115 = vpack.c.b16 %v867, %v863
    %v1116 = vpack.c.b16 %v868, %v864
    %v1117 = vpack.c.b16 %v869, %v865
    %v1118 = vpack.c.b16 %v874, %v870
    %v1119 = vpack.c.b16 %v875, %v871
    %v1120 = vpack.c.b16 %v876, %v872
    %v1121 = vpack.c.b16 %v877, %v873
    %v1122 = vpack.c.b16 %v882, %v878
    %v1123 = vpack.c.b16 %v883, %v879
    %v1124 = vpack.c.b16 %v884, %v880
    %v1125 = vpack.c.b16 %v885, %v881
    %v1126 = vpack.c.b16 %v890, %v886
    %v1127 = vpack.c.b16 %v891, %v887
    %v1128 = vpack.c.b16 %v892, %v888
    %v1129 = vpack.c.b16 %v893, %v889
    %v1130 = vpack.c.b16 %v898, %v894
    %v1131 = vpack.c.b16 %v899, %v895
    %v1132 = vpack.c.b16 %v900, %v896
    %v1133 = vpack.c.b16 %v901, %v897
    %v1134 = vpack.c.b16 %v906, %v902
    %v1135 = vpack.c.b16 %v907, %v903
    %v1136 = vpack.c.b16 %v908, %v904
    %v1137 = vpack.c.b16 %v909, %v905
    %v1138 = vpack.c.b16 %v914, %v910
    %v1139 = vpack.c.b16 %v915, %v911
    %v1140 = vpack.c.b16 %v916, %v912
    %v1141 = vpack.c.b16 %v917, %v913
    %v1142 = vpack.c.b16 %v922, %v918
    %v1143 = vpack.c.b16 %v923, %v919
    %v1144 = vpack.c.b16 %v924, %v920
    %v1145 = vpack.c.b16 %v925, %v921
    %v1146 = vpack.c.b16 %v930, %v926
    %v1147 = vpack.c.b16 %v931, %v927
    %v1148 = vpack.c.b16 %v932, %v928
    %v1149 = vpack.c.b16 %v933, %v929
    %v1150 = vpack.c.b16 %v938, %v934
    %v1151 = vpack.c.b16 %v939, %v935
    %v1152 = vpack.c.b16 %v940, %v936
    %v1153 = vpack.c.b16 %v941, %v937
    %v1154 = vpack.c.b16 %v946, %v942
    %v1155 = vpack.c.b16 %v947, %v943
    %v1156 = vpack.c.b16 %v948, %v944
    %v1157 = vpack.c.b16 %v949, %v945
    %v1158 = vpack.c.b16 %v954, %v950
    %v1159 = vpack.c.b16 %v955, %v951
    %v1160 = vpack.c.b16 %v956, %v952
    %v1161 = vpack.c.b16 %v957, %v953
    %v1162 = vpack.c.b16 %v962, %v958
    %v1163 = vpack.c.b16 %v963, %v959
    %v1164 = vpack.c.b16 %v964, %v960
    %v1165 = vpack.c.b16 %v965, %v961
    %v1166 = vpack.c.b16 %v970, %v966
    %v1167 = vpack.c.b16 %v971, %v967
    %v1168 = vpack.c.b16 %v972, %v968
    %v1169 = vpack.c.b16 %v973, %v969
    %vm1366 = vcmask 130048
    %v1368 = vsel %vm1366, %v158, 0
    %v1371 = vsel %vm1366, %v165, 0
    %v1374 = vsel %vm1366, %v172, 0
    %v1377 = vsel %vm1366, %v179, 0
    %1379 = vmatpush.bf16.msra.mxu0 %v1002
    %1380 = vmatpush.bf16.msra.mxu0 %v998
    %1381 = vmatpush.bf16.msra.mxu0 %v994
    %1382 = vmatpush.bf16.msra.mxu0 %v990
    %1383 = vmatpush.bf16.msra.mxu0 %v986
    %1384 = vmatpush.bf16.msra.mxu0 %v982
    %1385 = vmatpush.bf16.msra.mxu0 %v978
    %1386 = vmatpush.bf16.msra.mxu0 %v974
    %1387 = vmatmul.bf16.gmra.mxu0 %v152
    %v1388 = vpop.f32.mrf.mxu0
    %v1389 = vadd.f32 %v378, %v1388
    %v1390 = vpop.f32.mrf.mxu0
    %v1391 = vadd.f32 %v378, %v1390
    %1392 = vmatmul.bf16.gmra.mxu0 %v159
    %v1393 = vpop.f32.mrf.mxu0
    %v1394 = vadd.f32 %v378, %v1393
    %v1395 = vpop.f32.mrf.mxu0
    %v1396 = vadd.f32 %v378, %v1395
    %1397 = vmatmul.bf16.gmra.mxu0 %v166
    %v1398 = vpop.f32.mrf.mxu0
    %v1399 = vadd.f32 %v378, %v1398
    %v1400 = vpop.f32.mrf.mxu0
    %v1401 = vadd.f32 %v378, %v1400
    %1402 = vmatmul.bf16.gmra.mxu0 %v173
    %v1403 = vpop.f32.mrf.mxu0
    %v1404 = vadd.f32 %v378, %v1403
    %v1405 = vpop.f32.mrf.mxu0
    %v1406 = vadd.f32 %v378, %v1405
    %1407 = vdwg.mxu0
    %1408 = vmatpush.bf16.msra.mxu0 %v1034
    %1409 = vmatpush.bf16.msra.mxu0 %v1030
    %1410 = vmatpush.bf16.msra.mxu0 %v1026
    %1411 = vmatpush.bf16.msra.mxu0 %v1022
    %1412 = vmatpush.bf16.msra.mxu0 %v1018
    %1413 = vmatpush.bf16.msra.mxu0 %v1014
    %1414 = vmatpush.bf16.msra.mxu0 %v1010
    %1415 = vmatpush.bf16.msra.mxu0 %v1006
    %1416 = vmatmul.bf16.gmra.mxu0 %v153
    %v1417 = vpop.f32.mrf.mxu0
    %v1418 = vadd.f32 %v1389, %v1417
    %v1419 = vpop.f32.mrf.mxu0
    %v1420 = vadd.f32 %v1391, %v1419
    %1421 = vmatmul.bf16.gmra.mxu0 %v160
    %v1422 = vpop.f32.mrf.mxu0
    %v1423 = vadd.f32 %v1394, %v1422
    %v1424 = vpop.f32.mrf.mxu0
    %v1425 = vadd.f32 %v1396, %v1424
    %1426 = vmatmul.bf16.gmra.mxu0 %v167
    %v1427 = vpop.f32.mrf.mxu0
    %v1428 = vadd.f32 %v1399, %v1427
    %v1429 = vpop.f32.mrf.mxu0
    %v1430 = vadd.f32 %v1401, %v1429
    %1431 = vmatmul.bf16.gmra.mxu0 %v174
    %v1432 = vpop.f32.mrf.mxu0
    %v1433 = vadd.f32 %v1404, %v1432
    %v1434 = vpop.f32.mrf.mxu0
    %v1435 = vadd.f32 %v1406, %v1434
    %1436 = vdwg.mxu0
    %1437 = vmatpush.bf16.msra.mxu0 %v1066
    %1438 = vmatpush.bf16.msra.mxu0 %v1062
    %1439 = vmatpush.bf16.msra.mxu0 %v1058
    %1440 = vmatpush.bf16.msra.mxu0 %v1054
    %1441 = vmatpush.bf16.msra.mxu0 %v1050
    %1442 = vmatpush.bf16.msra.mxu0 %v1046
    %1443 = vmatpush.bf16.msra.mxu0 %v1042
    %1444 = vmatpush.bf16.msra.mxu0 %v1038
    %1445 = vmatmul.bf16.gmra.mxu0 %v154
    %v1446 = vpop.f32.mrf.mxu0
    %v1447 = vadd.f32 %v1418, %v1446
    %v1448 = vpop.f32.mrf.mxu0
    %v1449 = vadd.f32 %v1420, %v1448
    %1450 = vmatmul.bf16.gmra.mxu0 %v161
    %v1451 = vpop.f32.mrf.mxu0
    %v1452 = vadd.f32 %v1423, %v1451
    %v1453 = vpop.f32.mrf.mxu0
    %v1454 = vadd.f32 %v1425, %v1453
    %1455 = vmatmul.bf16.gmra.mxu0 %v168
    %v1456 = vpop.f32.mrf.mxu0
    %v1457 = vadd.f32 %v1428, %v1456
    %v1458 = vpop.f32.mrf.mxu0
    %v1459 = vadd.f32 %v1430, %v1458
    %1460 = vmatmul.bf16.gmra.mxu0 %v175
    %v1461 = vpop.f32.mrf.mxu0
    %v1462 = vadd.f32 %v1433, %v1461
    %v1463 = vpop.f32.mrf.mxu0
    %v1464 = vadd.f32 %v1435, %v1463
    %1465 = vdwg.mxu0
    %1466 = vmatpush.bf16.msra.mxu0 %v1098
    %1467 = vmatpush.bf16.msra.mxu0 %v1094
    %1468 = vmatpush.bf16.msra.mxu0 %v1090
    %1469 = vmatpush.bf16.msra.mxu0 %v1086
    %1470 = vmatpush.bf16.msra.mxu0 %v1082
    %1471 = vmatpush.bf16.msra.mxu0 %v1078
    %1472 = vmatpush.bf16.msra.mxu0 %v1074
    %1473 = vmatpush.bf16.msra.mxu0 %v1070
    %1474 = vmatmul.bf16.gmra.mxu0 %v155
    %v1475 = vpop.f32.mrf.mxu0
    %v1476 = vadd.f32 %v1447, %v1475
    %v1477 = vpop.f32.mrf.mxu0
    %v1478 = vadd.f32 %v1449, %v1477
    %1479 = vmatmul.bf16.gmra.mxu0 %v162
    %v1480 = vpop.f32.mrf.mxu0
    %v1481 = vadd.f32 %v1452, %v1480
    %v1482 = vpop.f32.mrf.mxu0
    %v1483 = vadd.f32 %v1454, %v1482
    %1484 = vmatmul.bf16.gmra.mxu0 %v169
    %v1485 = vpop.f32.mrf.mxu0
    %v1486 = vadd.f32 %v1457, %v1485
    %v1487 = vpop.f32.mrf.mxu0
    %v1488 = vadd.f32 %v1459, %v1487
    %1489 = vmatmul.bf16.gmra.mxu0 %v176
    %v1490 = vpop.f32.mrf.mxu0
    %v1491 = vadd.f32 %v1462, %v1490
    %v1492 = vpop.f32.mrf.mxu0
    %v1493 = vadd.f32 %v1464, %v1492
    %1494 = vdwg.mxu0
    %1495 = vmatpush.bf16.msra.mxu0 %v1130
    %1496 = vmatpush.bf16.msra.mxu0 %v1126
    %1497 = vmatpush.bf16.msra.mxu0 %v1122
    %1498 = vmatpush.bf16.msra.mxu0 %v1118
    %1499 = vmatpush.bf16.msra.mxu0 %v1114
    %1500 = vmatpush.bf16.msra.mxu0 %v1110
    %1501 = vmatpush.bf16.msra.mxu0 %v1106
    %1502 = vmatpush.bf16.msra.mxu0 %v1102
    %1503 = vmatmul.bf16.gmra.mxu0 %v156
    %v1504 = vpop.f32.mrf.mxu0
    %v1505 = vadd.f32 %v1476, %v1504
    %v1506 = vpop.f32.mrf.mxu0
    %v1507 = vadd.f32 %v1478, %v1506
    %1508 = vmatmul.bf16.gmra.mxu0 %v163
    %v1509 = vpop.f32.mrf.mxu0
    %v1510 = vadd.f32 %v1481, %v1509
    %v1511 = vpop.f32.mrf.mxu0
    %v1512 = vadd.f32 %v1483, %v1511
    %1513 = vmatmul.bf16.gmra.mxu0 %v170
    %v1514 = vpop.f32.mrf.mxu0
    %v1515 = vadd.f32 %v1486, %v1514
    %v1516 = vpop.f32.mrf.mxu0
    %v1517 = vadd.f32 %v1488, %v1516
    %1518 = vmatmul.bf16.gmra.mxu0 %v177
    %v1519 = vpop.f32.mrf.mxu0
    %v1520 = vadd.f32 %v1491, %v1519
    %v1521 = vpop.f32.mrf.mxu0
    %v1522 = vadd.f32 %v1493, %v1521
    %1523 = vdwg.mxu0
    %1524 = vmatpush.bf16.msra.mxu0 %v1162
    %1525 = vmatpush.bf16.msra.mxu0 %v1158
    %1526 = vmatpush.bf16.msra.mxu0 %v1154
    %1527 = vmatpush.bf16.msra.mxu0 %v1150
    %1528 = vmatpush.bf16.msra.mxu0 %v1146
    %1529 = vmatpush.bf16.msra.mxu0 %v1142
    %1530 = vmatpush.bf16.msra.mxu0 %v1138
    %1531 = vmatpush.bf16.msra.mxu0 %v1134
    %1532 = vmatmul.bf16.gmra.mxu0 %v157
    %v1533 = vpop.f32.mrf.mxu0
    %v1534 = vadd.f32 %v1505, %v1533
    %v1535 = vpop.f32.mrf.mxu0
    %v1536 = vadd.f32 %v1507, %v1535
    %1537 = vmatmul.bf16.gmra.mxu0 %v164
    %v1538 = vpop.f32.mrf.mxu0
    %v1539 = vadd.f32 %v1510, %v1538
    %v1540 = vpop.f32.mrf.mxu0
    %v1541 = vadd.f32 %v1512, %v1540
    %1542 = vmatmul.bf16.gmra.mxu0 %v171
    %v1543 = vpop.f32.mrf.mxu0
    %v1544 = vadd.f32 %v1515, %v1543
    %v1545 = vpop.f32.mrf.mxu0
    %v1546 = vadd.f32 %v1517, %v1545
    %1547 = vmatmul.bf16.gmra.mxu0 %v178
    %v1548 = vpop.f32.mrf.mxu0
    %v1549 = vadd.f32 %v1520, %v1548
    %v1550 = vpop.f32.mrf.mxu0
    %v1551 = vadd.f32 %v1522, %v1550
    %1552 = vdwg.mxu0
    %1553 = vmatpush.bf16.msra.mxu0 0
    %1554 = vmatpush.bf16.msra.mxu0 0
    %1555 = vmatpush.bf16.msra.mxu0 0
    %1556 = vmatpush.bf16.msra.mxu0 0
    %1557 = vmatpush.bf16.msra.mxu0 0
    %1558 = vmatpush.bf16.msra.mxu0 0
    %1559 = vmatpush.bf16.msra.mxu0 0
    %1560 = vmatpush.bf16.msra.mxu0 %v1166
    %1561 = vmatmul.bf16.gmra.mxu0 %v1368
    %v1562 = vpop.f32.mrf.mxu0
    %v1563 = vadd.f32 %v1534, %v1562
    %v1564 = vpop.f32.mrf.mxu0
    %v1565 = vadd.f32 %v1536, %v1564
    %1566 = vmatmul.bf16.gmra.mxu0 %v1371
    %v1567 = vpop.f32.mrf.mxu0
    %v1568 = vadd.f32 %v1539, %v1567
    %v1569 = vpop.f32.mrf.mxu0
    %v1570 = vadd.f32 %v1541, %v1569
    %1571 = vmatmul.bf16.gmra.mxu0 %v1374
    %v1572 = vpop.f32.mrf.mxu0
    %v1573 = vadd.f32 %v1544, %v1572
    %v1574 = vpop.f32.mrf.mxu0
    %v1575 = vadd.f32 %v1546, %v1574
    %1576 = vmatmul.bf16.gmra.mxu0 %v1377
    %v1577 = vpop.f32.mrf.mxu0
    %v1578 = vadd.f32 %v1549, %v1577
    %v1579 = vpop.f32.mrf.mxu0
    %v1580 = vadd.f32 %v1551, %v1579
    %1581 = vdwg.mxu0
    %1582 = vmatpush.bf16.msra.mxu0 %v1003
    %1583 = vmatpush.bf16.msra.mxu0 %v999
    %1584 = vmatpush.bf16.msra.mxu0 %v995
    %1585 = vmatpush.bf16.msra.mxu0 %v991
    %1586 = vmatpush.bf16.msra.mxu0 %v987
    %1587 = vmatpush.bf16.msra.mxu0 %v983
    %1588 = vmatpush.bf16.msra.mxu0 %v979
    %1589 = vmatpush.bf16.msra.mxu0 %v975
    %1590 = vmatmul.bf16.gmra.mxu0 %v152
    %v1591 = vpop.f32.mrf.mxu0
    %v1592 = vadd.f32 %v379, %v1591
    %v1593 = vpop.f32.mrf.mxu0
    %v1594 = vadd.f32 %v379, %v1593
    %1595 = vmatmul.bf16.gmra.mxu0 %v159
    %v1596 = vpop.f32.mrf.mxu0
    %v1597 = vadd.f32 %v379, %v1596
    %v1598 = vpop.f32.mrf.mxu0
    %v1599 = vadd.f32 %v379, %v1598
    %1600 = vmatmul.bf16.gmra.mxu0 %v166
    %v1601 = vpop.f32.mrf.mxu0
    %v1602 = vadd.f32 %v379, %v1601
    %v1603 = vpop.f32.mrf.mxu0
    %v1604 = vadd.f32 %v379, %v1603
    %1605 = vmatmul.bf16.gmra.mxu0 %v173
    %v1606 = vpop.f32.mrf.mxu0
    %v1607 = vadd.f32 %v379, %v1606
    %v1608 = vpop.f32.mrf.mxu0
    %v1609 = vadd.f32 %v379, %v1608
    %1610 = vdwg.mxu0
    %1611 = vmatpush.bf16.msra.mxu0 %v1035
    %1612 = vmatpush.bf16.msra.mxu0 %v1031
    %1613 = vmatpush.bf16.msra.mxu0 %v1027
    %1614 = vmatpush.bf16.msra.mxu0 %v1023
    %1615 = vmatpush.bf16.msra.mxu0 %v1019
    %1616 = vmatpush.bf16.msra.mxu0 %v1015
    %1617 = vmatpush.bf16.msra.mxu0 %v1011
    %1618 = vmatpush.bf16.msra.mxu0 %v1007
    %1619 = vmatmul.bf16.gmra.mxu0 %v153
    %v1620 = vpop.f32.mrf.mxu0
    %v1621 = vadd.f32 %v1592, %v1620
    %v1622 = vpop.f32.mrf.mxu0
    %v1623 = vadd.f32 %v1594, %v1622
    %1624 = vmatmul.bf16.gmra.mxu0 %v160
    %v1625 = vpop.f32.mrf.mxu0
    %v1626 = vadd.f32 %v1597, %v1625
    %v1627 = vpop.f32.mrf.mxu0
    %v1628 = vadd.f32 %v1599, %v1627
    %1629 = vmatmul.bf16.gmra.mxu0 %v167
    %v1630 = vpop.f32.mrf.mxu0
    %v1631 = vadd.f32 %v1602, %v1630
    %v1632 = vpop.f32.mrf.mxu0
    %v1633 = vadd.f32 %v1604, %v1632
    %1634 = vmatmul.bf16.gmra.mxu0 %v174
    %v1635 = vpop.f32.mrf.mxu0
    %v1636 = vadd.f32 %v1607, %v1635
    %v1637 = vpop.f32.mrf.mxu0
    %v1638 = vadd.f32 %v1609, %v1637
    %1639 = vdwg.mxu0
    %1640 = vmatpush.bf16.msra.mxu0 %v1067
    %1641 = vmatpush.bf16.msra.mxu0 %v1063
    %1642 = vmatpush.bf16.msra.mxu0 %v1059
    %1643 = vmatpush.bf16.msra.mxu0 %v1055
    %1644 = vmatpush.bf16.msra.mxu0 %v1051
    %1645 = vmatpush.bf16.msra.mxu0 %v1047
    %1646 = vmatpush.bf16.msra.mxu0 %v1043
    %1647 = vmatpush.bf16.msra.mxu0 %v1039
    %1648 = vmatmul.bf16.gmra.mxu0 %v154
    %v1649 = vpop.f32.mrf.mxu0
    %v1650 = vadd.f32 %v1621, %v1649
    %v1651 = vpop.f32.mrf.mxu0
    %v1652 = vadd.f32 %v1623, %v1651
    %1653 = vmatmul.bf16.gmra.mxu0 %v161
    %v1654 = vpop.f32.mrf.mxu0
    %v1655 = vadd.f32 %v1626, %v1654
    %v1656 = vpop.f32.mrf.mxu0
    %v1657 = vadd.f32 %v1628, %v1656
    %1658 = vmatmul.bf16.gmra.mxu0 %v168
    %v1659 = vpop.f32.mrf.mxu0
    %v1660 = vadd.f32 %v1631, %v1659
    %v1661 = vpop.f32.mrf.mxu0
    %v1662 = vadd.f32 %v1633, %v1661
    %1663 = vmatmul.bf16.gmra.mxu0 %v175
    %v1664 = vpop.f32.mrf.mxu0
    %v1665 = vadd.f32 %v1636, %v1664
    %v1666 = vpop.f32.mrf.mxu0
    %v1667 = vadd.f32 %v1638, %v1666
    %1668 = vdwg.mxu0
    %1669 = vmatpush.bf16.msra.mxu0 %v1099
    %1670 = vmatpush.bf16.msra.mxu0 %v1095
    %1671 = vmatpush.bf16.msra.mxu0 %v1091
    %1672 = vmatpush.bf16.msra.mxu0 %v1087
    %1673 = vmatpush.bf16.msra.mxu0 %v1083
    %1674 = vmatpush.bf16.msra.mxu0 %v1079
    %1675 = vmatpush.bf16.msra.mxu0 %v1075
    %1676 = vmatpush.bf16.msra.mxu0 %v1071
    %1677 = vmatmul.bf16.gmra.mxu0 %v155
    %v1678 = vpop.f32.mrf.mxu0
    %v1679 = vadd.f32 %v1650, %v1678
    %v1680 = vpop.f32.mrf.mxu0
    %v1681 = vadd.f32 %v1652, %v1680
    %1682 = vmatmul.bf16.gmra.mxu0 %v162
    %v1683 = vpop.f32.mrf.mxu0
    %v1684 = vadd.f32 %v1655, %v1683
    %v1685 = vpop.f32.mrf.mxu0
    %v1686 = vadd.f32 %v1657, %v1685
    %1687 = vmatmul.bf16.gmra.mxu0 %v169
    %v1688 = vpop.f32.mrf.mxu0
    %v1689 = vadd.f32 %v1660, %v1688
    %v1690 = vpop.f32.mrf.mxu0
    %v1691 = vadd.f32 %v1662, %v1690
    %1692 = vmatmul.bf16.gmra.mxu0 %v176
    %v1693 = vpop.f32.mrf.mxu0
    %v1694 = vadd.f32 %v1665, %v1693
    %v1695 = vpop.f32.mrf.mxu0
    %v1696 = vadd.f32 %v1667, %v1695
    %1697 = vdwg.mxu0
    %1698 = vmatpush.bf16.msra.mxu0 %v1131
    %1699 = vmatpush.bf16.msra.mxu0 %v1127
    %1700 = vmatpush.bf16.msra.mxu0 %v1123
    %1701 = vmatpush.bf16.msra.mxu0 %v1119
    %1702 = vmatpush.bf16.msra.mxu0 %v1115
    %1703 = vmatpush.bf16.msra.mxu0 %v1111
    %1704 = vmatpush.bf16.msra.mxu0 %v1107
    %1705 = vmatpush.bf16.msra.mxu0 %v1103
    %1706 = vmatmul.bf16.gmra.mxu0 %v156
    %v1707 = vpop.f32.mrf.mxu0
    %v1708 = vadd.f32 %v1679, %v1707
    %v1709 = vpop.f32.mrf.mxu0
    %v1710 = vadd.f32 %v1681, %v1709
    %1711 = vmatmul.bf16.gmra.mxu0 %v163
    %v1712 = vpop.f32.mrf.mxu0
    %v1713 = vadd.f32 %v1684, %v1712
    %v1714 = vpop.f32.mrf.mxu0
    %v1715 = vadd.f32 %v1686, %v1714
    %1716 = vmatmul.bf16.gmra.mxu0 %v170
    %v1717 = vpop.f32.mrf.mxu0
    %v1718 = vadd.f32 %v1689, %v1717
    %v1719 = vpop.f32.mrf.mxu0
    %v1720 = vadd.f32 %v1691, %v1719
    %1721 = vmatmul.bf16.gmra.mxu0 %v177
    %v1722 = vpop.f32.mrf.mxu0
    %v1723 = vadd.f32 %v1694, %v1722
    %v1724 = vpop.f32.mrf.mxu0
    %v1725 = vadd.f32 %v1696, %v1724
    %1726 = vdwg.mxu0
    %1727 = vmatpush.bf16.msra.mxu0 %v1163
    %1728 = vmatpush.bf16.msra.mxu0 %v1159
    %1729 = vmatpush.bf16.msra.mxu0 %v1155
    %1730 = vmatpush.bf16.msra.mxu0 %v1151
    %1731 = vmatpush.bf16.msra.mxu0 %v1147
    %1732 = vmatpush.bf16.msra.mxu0 %v1143
    %1733 = vmatpush.bf16.msra.mxu0 %v1139
    %1734 = vmatpush.bf16.msra.mxu0 %v1135
    %1735 = vmatmul.bf16.gmra.mxu0 %v157
    %v1736 = vpop.f32.mrf.mxu0
    %v1737 = vadd.f32 %v1708, %v1736
    %v1738 = vpop.f32.mrf.mxu0
    %v1739 = vadd.f32 %v1710, %v1738
    %1740 = vmatmul.bf16.gmra.mxu0 %v164
    %v1741 = vpop.f32.mrf.mxu0
    %v1742 = vadd.f32 %v1713, %v1741
    %v1743 = vpop.f32.mrf.mxu0
    %v1744 = vadd.f32 %v1715, %v1743
    %1745 = vmatmul.bf16.gmra.mxu0 %v171
    %v1746 = vpop.f32.mrf.mxu0
    %v1747 = vadd.f32 %v1718, %v1746
    %v1748 = vpop.f32.mrf.mxu0
    %v1749 = vadd.f32 %v1720, %v1748
    %1750 = vmatmul.bf16.gmra.mxu0 %v178
    %v1751 = vpop.f32.mrf.mxu0
    %v1752 = vadd.f32 %v1723, %v1751
    %v1753 = vpop.f32.mrf.mxu0
    %v1754 = vadd.f32 %v1725, %v1753
    %1755 = vdwg.mxu0
    %1756 = vmatpush.bf16.msra.mxu0 0
    %1757 = vmatpush.bf16.msra.mxu0 0
    %1758 = vmatpush.bf16.msra.mxu0 0
    %1759 = vmatpush.bf16.msra.mxu0 0
    %1760 = vmatpush.bf16.msra.mxu0 0
    %1761 = vmatpush.bf16.msra.mxu0 0
    %1762 = vmatpush.bf16.msra.mxu0 0
    %1763 = vmatpush.bf16.msra.mxu0 %v1167
    %1764 = vmatmul.bf16.gmra.mxu0 %v1368
    %v1765 = vpop.f32.mrf.mxu0
    %v1766 = vadd.f32 %v1737, %v1765
    %v1767 = vpop.f32.mrf.mxu0
    %v1768 = vadd.f32 %v1739, %v1767
    %1769 = vmatmul.bf16.gmra.mxu0 %v1371
    %v1770 = vpop.f32.mrf.mxu0
    %v1771 = vadd.f32 %v1742, %v1770
    %v1772 = vpop.f32.mrf.mxu0
    %v1773 = vadd.f32 %v1744, %v1772
    %1774 = vmatmul.bf16.gmra.mxu0 %v1374
    %v1775 = vpop.f32.mrf.mxu0
    %v1776 = vadd.f32 %v1747, %v1775
    %v1777 = vpop.f32.mrf.mxu0
    %v1778 = vadd.f32 %v1749, %v1777
    %1779 = vmatmul.bf16.gmra.mxu0 %v1377
    %v1780 = vpop.f32.mrf.mxu0
    %v1781 = vadd.f32 %v1752, %v1780
    %v1782 = vpop.f32.mrf.mxu0
    %v1783 = vadd.f32 %v1754, %v1782
    %1784 = vdwg.mxu0
    %1785 = vmatpush.bf16.msra.mxu0 %v1004
    %1786 = vmatpush.bf16.msra.mxu0 %v1000
    %1787 = vmatpush.bf16.msra.mxu0 %v996
    %1788 = vmatpush.bf16.msra.mxu0 %v992
    %1789 = vmatpush.bf16.msra.mxu0 %v988
    %1790 = vmatpush.bf16.msra.mxu0 %v984
    %1791 = vmatpush.bf16.msra.mxu0 %v980
    %1792 = vmatpush.bf16.msra.mxu0 %v976
    %1793 = vmatmul.bf16.gmra.mxu0 %v152
    %v1794 = vpop.f32.mrf.mxu0
    %v1795 = vadd.f32 %v380, %v1794
    %v1796 = vpop.f32.mrf.mxu0
    %v1797 = vadd.f32 %v380, %v1796
    %1798 = vmatmul.bf16.gmra.mxu0 %v159
    %v1799 = vpop.f32.mrf.mxu0
    %v1800 = vadd.f32 %v380, %v1799
    %v1801 = vpop.f32.mrf.mxu0
    %v1802 = vadd.f32 %v380, %v1801
    %1803 = vmatmul.bf16.gmra.mxu0 %v166
    %v1804 = vpop.f32.mrf.mxu0
    %v1805 = vadd.f32 %v380, %v1804
    %v1806 = vpop.f32.mrf.mxu0
    %v1807 = vadd.f32 %v380, %v1806
    %1808 = vmatmul.bf16.gmra.mxu0 %v173
    %v1809 = vpop.f32.mrf.mxu0
    %v1810 = vadd.f32 %v380, %v1809
    %v1811 = vpop.f32.mrf.mxu0
    %v1812 = vadd.f32 %v380, %v1811
    %1813 = vdwg.mxu0
    %1814 = vmatpush.bf16.msra.mxu0 %v1036
    %1815 = vmatpush.bf16.msra.mxu0 %v1032
    %1816 = vmatpush.bf16.msra.mxu0 %v1028
    %1817 = vmatpush.bf16.msra.mxu0 %v1024
    %1818 = vmatpush.bf16.msra.mxu0 %v1020
    %1819 = vmatpush.bf16.msra.mxu0 %v1016
    %1820 = vmatpush.bf16.msra.mxu0 %v1012
    %1821 = vmatpush.bf16.msra.mxu0 %v1008
    %1822 = vmatmul.bf16.gmra.mxu0 %v153
    %v1823 = vpop.f32.mrf.mxu0
    %v1824 = vadd.f32 %v1795, %v1823
    %v1825 = vpop.f32.mrf.mxu0
    %v1826 = vadd.f32 %v1797, %v1825
    %1827 = vmatmul.bf16.gmra.mxu0 %v160
    %v1828 = vpop.f32.mrf.mxu0
    %v1829 = vadd.f32 %v1800, %v1828
    %v1830 = vpop.f32.mrf.mxu0
    %v1831 = vadd.f32 %v1802, %v1830
    %1832 = vmatmul.bf16.gmra.mxu0 %v167
    %v1833 = vpop.f32.mrf.mxu0
    %v1834 = vadd.f32 %v1805, %v1833
    %v1835 = vpop.f32.mrf.mxu0
    %v1836 = vadd.f32 %v1807, %v1835
    %1837 = vmatmul.bf16.gmra.mxu0 %v174
    %v1838 = vpop.f32.mrf.mxu0
    %v1839 = vadd.f32 %v1810, %v1838
    %v1840 = vpop.f32.mrf.mxu0
    %v1841 = vadd.f32 %v1812, %v1840
    %1842 = vdwg.mxu0
    %1843 = vmatpush.bf16.msra.mxu0 %v1068
    %1844 = vmatpush.bf16.msra.mxu0 %v1064
    %1845 = vmatpush.bf16.msra.mxu0 %v1060
    %1846 = vmatpush.bf16.msra.mxu0 %v1056
    %1847 = vmatpush.bf16.msra.mxu0 %v1052
    %1848 = vmatpush.bf16.msra.mxu0 %v1048
    %1849 = vmatpush.bf16.msra.mxu0 %v1044
    %1850 = vmatpush.bf16.msra.mxu0 %v1040
    %1851 = vmatmul.bf16.gmra.mxu0 %v154
    %v1852 = vpop.f32.mrf.mxu0
    %v1853 = vadd.f32 %v1824, %v1852
    %v1854 = vpop.f32.mrf.mxu0
    %v1855 = vadd.f32 %v1826, %v1854
    %1856 = vmatmul.bf16.gmra.mxu0 %v161
    %v1857 = vpop.f32.mrf.mxu0
    %v1858 = vadd.f32 %v1829, %v1857
    %v1859 = vpop.f32.mrf.mxu0
    %v1860 = vadd.f32 %v1831, %v1859
    %1861 = vmatmul.bf16.gmra.mxu0 %v168
    %v1862 = vpop.f32.mrf.mxu0
    %v1863 = vadd.f32 %v1834, %v1862
    %v1864 = vpop.f32.mrf.mxu0
    %v1865 = vadd.f32 %v1836, %v1864
    %1866 = vmatmul.bf16.gmra.mxu0 %v175
    %v1867 = vpop.f32.mrf.mxu0
    %v1868 = vadd.f32 %v1839, %v1867
    %v1869 = vpop.f32.mrf.mxu0
    %v1870 = vadd.f32 %v1841, %v1869
    %1871 = vdwg.mxu0
    %1872 = vmatpush.bf16.msra.mxu0 %v1100
    %1873 = vmatpush.bf16.msra.mxu0 %v1096
    %1874 = vmatpush.bf16.msra.mxu0 %v1092
    %1875 = vmatpush.bf16.msra.mxu0 %v1088
    %1876 = vmatpush.bf16.msra.mxu0 %v1084
    %1877 = vmatpush.bf16.msra.mxu0 %v1080
    %1878 = vmatpush.bf16.msra.mxu0 %v1076
    %1879 = vmatpush.bf16.msra.mxu0 %v1072
    %1880 = vmatmul.bf16.gmra.mxu0 %v155
    %v1881 = vpop.f32.mrf.mxu0
    %v1882 = vadd.f32 %v1853, %v1881
    %v1883 = vpop.f32.mrf.mxu0
    %v1884 = vadd.f32 %v1855, %v1883
    %1885 = vmatmul.bf16.gmra.mxu0 %v162
    %v1886 = vpop.f32.mrf.mxu0
    %v1887 = vadd.f32 %v1858, %v1886
    %v1888 = vpop.f32.mrf.mxu0
    %v1889 = vadd.f32 %v1860, %v1888
    %1890 = vmatmul.bf16.gmra.mxu0 %v169
    %v1891 = vpop.f32.mrf.mxu0
    %v1892 = vadd.f32 %v1863, %v1891
    %v1893 = vpop.f32.mrf.mxu0
    %v1894 = vadd.f32 %v1865, %v1893
    %1895 = vmatmul.bf16.gmra.mxu0 %v176
    %v1896 = vpop.f32.mrf.mxu0
    %v1897 = vadd.f32 %v1868, %v1896
    %v1898 = vpop.f32.mrf.mxu0
    %v1899 = vadd.f32 %v1870, %v1898
    %1900 = vdwg.mxu0
    %1901 = vmatpush.bf16.msra.mxu0 %v1132
    %1902 = vmatpush.bf16.msra.mxu0 %v1128
    %1903 = vmatpush.bf16.msra.mxu0 %v1124
    %1904 = vmatpush.bf16.msra.mxu0 %v1120
    %1905 = vmatpush.bf16.msra.mxu0 %v1116
    %1906 = vmatpush.bf16.msra.mxu0 %v1112
    %1907 = vmatpush.bf16.msra.mxu0 %v1108
    %1908 = vmatpush.bf16.msra.mxu0 %v1104
    %1909 = vmatmul.bf16.gmra.mxu0 %v156
    %v1910 = vpop.f32.mrf.mxu0
    %v1911 = vadd.f32 %v1882, %v1910
    %v1912 = vpop.f32.mrf.mxu0
    %v1913 = vadd.f32 %v1884, %v1912
    %1914 = vmatmul.bf16.gmra.mxu0 %v163
    %v1915 = vpop.f32.mrf.mxu0
    %v1916 = vadd.f32 %v1887, %v1915
    %v1917 = vpop.f32.mrf.mxu0
    %v1918 = vadd.f32 %v1889, %v1917
    %1919 = vmatmul.bf16.gmra.mxu0 %v170
    %v1920 = vpop.f32.mrf.mxu0
    %v1921 = vadd.f32 %v1892, %v1920
    %v1922 = vpop.f32.mrf.mxu0
    %v1923 = vadd.f32 %v1894, %v1922
    %1924 = vmatmul.bf16.gmra.mxu0 %v177
    %v1925 = vpop.f32.mrf.mxu0
    %v1926 = vadd.f32 %v1897, %v1925
    %v1927 = vpop.f32.mrf.mxu0
    %v1928 = vadd.f32 %v1899, %v1927
    %1929 = vdwg.mxu0
    %1930 = vmatpush.bf16.msra.mxu0 %v1164
    %1931 = vmatpush.bf16.msra.mxu0 %v1160
    %1932 = vmatpush.bf16.msra.mxu0 %v1156
    %1933 = vmatpush.bf16.msra.mxu0 %v1152
    %1934 = vmatpush.bf16.msra.mxu0 %v1148
    %1935 = vmatpush.bf16.msra.mxu0 %v1144
    %1936 = vmatpush.bf16.msra.mxu0 %v1140
    %1937 = vmatpush.bf16.msra.mxu0 %v1136
    %1938 = vmatmul.bf16.gmra.mxu0 %v157
    %v1939 = vpop.f32.mrf.mxu0
    %v1940 = vadd.f32 %v1911, %v1939
    %v1941 = vpop.f32.mrf.mxu0
    %v1942 = vadd.f32 %v1913, %v1941
    %1943 = vmatmul.bf16.gmra.mxu0 %v164
    %v1944 = vpop.f32.mrf.mxu0
    %v1945 = vadd.f32 %v1916, %v1944
    %v1946 = vpop.f32.mrf.mxu0
    %v1947 = vadd.f32 %v1918, %v1946
    %1948 = vmatmul.bf16.gmra.mxu0 %v171
    %v1949 = vpop.f32.mrf.mxu0
    %v1950 = vadd.f32 %v1921, %v1949
    %v1951 = vpop.f32.mrf.mxu0
    %v1952 = vadd.f32 %v1923, %v1951
    %1953 = vmatmul.bf16.gmra.mxu0 %v178
    %v1954 = vpop.f32.mrf.mxu0
    %v1955 = vadd.f32 %v1926, %v1954
    %v1956 = vpop.f32.mrf.mxu0
    %v1957 = vadd.f32 %v1928, %v1956
    %1958 = vdwg.mxu0
    %1959 = vmatpush.bf16.msra.mxu0 0
    %1960 = vmatpush.bf16.msra.mxu0 0
    %1961 = vmatpush.bf16.msra.mxu0 0
    %1962 = vmatpush.bf16.msra.mxu0 0
    %1963 = vmatpush.bf16.msra.mxu0 0
    %1964 = vmatpush.bf16.msra.mxu0 0
    %1965 = vmatpush.bf16.msra.mxu0 0
    %1966 = vmatpush.bf16.msra.mxu0 %v1168
    %1967 = vmatmul.bf16.gmra.mxu0 %v1368
    %v1968 = vpop.f32.mrf.mxu0
    %v1969 = vadd.f32 %v1940, %v1968
    %v1970 = vpop.f32.mrf.mxu0
    %v1971 = vadd.f32 %v1942, %v1970
    %1972 = vmatmul.bf16.gmra.mxu0 %v1371
    %v1973 = vpop.f32.mrf.mxu0
    %v1974 = vadd.f32 %v1945, %v1973
    %v1975 = vpop.f32.mrf.mxu0
    %v1976 = vadd.f32 %v1947, %v1975
    %1977 = vmatmul.bf16.gmra.mxu0 %v1374
    %v1978 = vpop.f32.mrf.mxu0
    %v1979 = vadd.f32 %v1950, %v1978
    %v1980 = vpop.f32.mrf.mxu0
    %v1981 = vadd.f32 %v1952, %v1980
    %1982 = vmatmul.bf16.gmra.mxu0 %v1377
    %v1983 = vpop.f32.mrf.mxu0
    %v1984 = vadd.f32 %v1955, %v1983
    %v1985 = vpop.f32.mrf.mxu0
    %v1986 = vadd.f32 %v1957, %v1985
    %1987 = vdwg.mxu0
    %1988 = vmatpush.bf16.msra.mxu0 %v1005
    %1989 = vmatpush.bf16.msra.mxu0 %v1001
    %1990 = vmatpush.bf16.msra.mxu0 %v997
    %1991 = vmatpush.bf16.msra.mxu0 %v993
    %1992 = vmatpush.bf16.msra.mxu0 %v989
    %1993 = vmatpush.bf16.msra.mxu0 %v985
    %1994 = vmatpush.bf16.msra.mxu0 %v981
    %1995 = vmatpush.bf16.msra.mxu0 %v977
    %1996 = vmatmul.bf16.gmra.mxu0 %v152
    %v1997 = vpop.f32.mrf.mxu0
    %v1998 = vadd.f32 %v381, %v1997
    %v1999 = vpop.f32.mrf.mxu0
    %v2000 = vadd.f32 %v381, %v1999
    %2001 = vmatmul.bf16.gmra.mxu0 %v159
    %v2002 = vpop.f32.mrf.mxu0
    %v2003 = vadd.f32 %v381, %v2002
    %v2004 = vpop.f32.mrf.mxu0
    %v2005 = vadd.f32 %v381, %v2004
    %2006 = vmatmul.bf16.gmra.mxu0 %v166
    %v2007 = vpop.f32.mrf.mxu0
    %v2008 = vadd.f32 %v381, %v2007
    %v2009 = vpop.f32.mrf.mxu0
    %v2010 = vadd.f32 %v381, %v2009
    %2011 = vmatmul.bf16.gmra.mxu0 %v173
    %v2012 = vpop.f32.mrf.mxu0
    %v2013 = vadd.f32 %v381, %v2012
    %v2014 = vpop.f32.mrf.mxu0
    %v2015 = vadd.f32 %v381, %v2014
    %2016 = vdwg.mxu0
    %2017 = vmatpush.bf16.msra.mxu0 %v1037
    %2018 = vmatpush.bf16.msra.mxu0 %v1033
    %2019 = vmatpush.bf16.msra.mxu0 %v1029
    %2020 = vmatpush.bf16.msra.mxu0 %v1025
    %2021 = vmatpush.bf16.msra.mxu0 %v1021
    %2022 = vmatpush.bf16.msra.mxu0 %v1017
    %2023 = vmatpush.bf16.msra.mxu0 %v1013
    %2024 = vmatpush.bf16.msra.mxu0 %v1009
    %2025 = vmatmul.bf16.gmra.mxu0 %v153
    %v2026 = vpop.f32.mrf.mxu0
    %v2027 = vadd.f32 %v1998, %v2026
    %v2028 = vpop.f32.mrf.mxu0
    %v2029 = vadd.f32 %v2000, %v2028
    %2030 = vmatmul.bf16.gmra.mxu0 %v160
    %v2031 = vpop.f32.mrf.mxu0
    %v2032 = vadd.f32 %v2003, %v2031
    %v2033 = vpop.f32.mrf.mxu0
    %v2034 = vadd.f32 %v2005, %v2033
    %2035 = vmatmul.bf16.gmra.mxu0 %v167
    %v2036 = vpop.f32.mrf.mxu0
    %v2037 = vadd.f32 %v2008, %v2036
    %v2038 = vpop.f32.mrf.mxu0
    %v2039 = vadd.f32 %v2010, %v2038
    %2040 = vmatmul.bf16.gmra.mxu0 %v174
    %v2041 = vpop.f32.mrf.mxu0
    %v2042 = vadd.f32 %v2013, %v2041
    %v2043 = vpop.f32.mrf.mxu0
    %v2044 = vadd.f32 %v2015, %v2043
    %2045 = vdwg.mxu0
    %2046 = vmatpush.bf16.msra.mxu0 %v1069
    %2047 = vmatpush.bf16.msra.mxu0 %v1065
    %2048 = vmatpush.bf16.msra.mxu0 %v1061
    %2049 = vmatpush.bf16.msra.mxu0 %v1057
    %2050 = vmatpush.bf16.msra.mxu0 %v1053
    %2051 = vmatpush.bf16.msra.mxu0 %v1049
    %2052 = vmatpush.bf16.msra.mxu0 %v1045
    %2053 = vmatpush.bf16.msra.mxu0 %v1041
    %2054 = vmatmul.bf16.gmra.mxu0 %v154
    %v2055 = vpop.f32.mrf.mxu0
    %v2056 = vadd.f32 %v2027, %v2055
    %v2057 = vpop.f32.mrf.mxu0
    %v2058 = vadd.f32 %v2029, %v2057
    %2059 = vmatmul.bf16.gmra.mxu0 %v161
    %v2060 = vpop.f32.mrf.mxu0
    %v2061 = vadd.f32 %v2032, %v2060
    %v2062 = vpop.f32.mrf.mxu0
    %v2063 = vadd.f32 %v2034, %v2062
    %2064 = vmatmul.bf16.gmra.mxu0 %v168
    %v2065 = vpop.f32.mrf.mxu0
    %v2066 = vadd.f32 %v2037, %v2065
    %v2067 = vpop.f32.mrf.mxu0
    %v2068 = vadd.f32 %v2039, %v2067
    %2069 = vmatmul.bf16.gmra.mxu0 %v175
    %v2070 = vpop.f32.mrf.mxu0
    %v2071 = vadd.f32 %v2042, %v2070
    %v2072 = vpop.f32.mrf.mxu0
    %v2073 = vadd.f32 %v2044, %v2072
    %2074 = vdwg.mxu0
    %2075 = vmatpush.bf16.msra.mxu0 %v1101
    %2076 = vmatpush.bf16.msra.mxu0 %v1097
    %2077 = vmatpush.bf16.msra.mxu0 %v1093
    %2078 = vmatpush.bf16.msra.mxu0 %v1089
    %2079 = vmatpush.bf16.msra.mxu0 %v1085
    %2080 = vmatpush.bf16.msra.mxu0 %v1081
    %2081 = vmatpush.bf16.msra.mxu0 %v1077
    %2082 = vmatpush.bf16.msra.mxu0 %v1073
    %2083 = vmatmul.bf16.gmra.mxu0 %v155
    %v2084 = vpop.f32.mrf.mxu0
    %v2085 = vadd.f32 %v2056, %v2084
    %v2086 = vpop.f32.mrf.mxu0
    %v2087 = vadd.f32 %v2058, %v2086
    %2088 = vmatmul.bf16.gmra.mxu0 %v162
    %v2089 = vpop.f32.mrf.mxu0
    %v2090 = vadd.f32 %v2061, %v2089
    %v2091 = vpop.f32.mrf.mxu0
    %v2092 = vadd.f32 %v2063, %v2091
    %2093 = vmatmul.bf16.gmra.mxu0 %v169
    %v2094 = vpop.f32.mrf.mxu0
    %v2095 = vadd.f32 %v2066, %v2094
    %v2096 = vpop.f32.mrf.mxu0
    %v2097 = vadd.f32 %v2068, %v2096
    %2098 = vmatmul.bf16.gmra.mxu0 %v176
    %v2099 = vpop.f32.mrf.mxu0
    %v2100 = vadd.f32 %v2071, %v2099
    %v2101 = vpop.f32.mrf.mxu0
    %v2102 = vadd.f32 %v2073, %v2101
    %2103 = vdwg.mxu0
    %2104 = vmatpush.bf16.msra.mxu0 %v1133
    %2105 = vmatpush.bf16.msra.mxu0 %v1129
    %2106 = vmatpush.bf16.msra.mxu0 %v1125
    %2107 = vmatpush.bf16.msra.mxu0 %v1121
    %2108 = vmatpush.bf16.msra.mxu0 %v1117
    %2109 = vmatpush.bf16.msra.mxu0 %v1113
    %2110 = vmatpush.bf16.msra.mxu0 %v1109
    %2111 = vmatpush.bf16.msra.mxu0 %v1105
    %2112 = vmatmul.bf16.gmra.mxu0 %v156
    %v2113 = vpop.f32.mrf.mxu0
    %v2114 = vadd.f32 %v2085, %v2113
    %v2115 = vpop.f32.mrf.mxu0
    %v2116 = vadd.f32 %v2087, %v2115
    %2117 = vmatmul.bf16.gmra.mxu0 %v163
    %v2118 = vpop.f32.mrf.mxu0
    %v2119 = vadd.f32 %v2090, %v2118
    %v2120 = vpop.f32.mrf.mxu0
    %v2121 = vadd.f32 %v2092, %v2120
    %2122 = vmatmul.bf16.gmra.mxu0 %v170
    %v2123 = vpop.f32.mrf.mxu0
    %v2124 = vadd.f32 %v2095, %v2123
    %v2125 = vpop.f32.mrf.mxu0
    %v2126 = vadd.f32 %v2097, %v2125
    %2127 = vmatmul.bf16.gmra.mxu0 %v177
    %v2128 = vpop.f32.mrf.mxu0
    %v2129 = vadd.f32 %v2100, %v2128
    %v2130 = vpop.f32.mrf.mxu0
    %v2131 = vadd.f32 %v2102, %v2130
    %2132 = vdwg.mxu0
    %2133 = vmatpush.bf16.msra.mxu0 %v1165
    %2134 = vmatpush.bf16.msra.mxu0 %v1161
    %2135 = vmatpush.bf16.msra.mxu0 %v1157
    %2136 = vmatpush.bf16.msra.mxu0 %v1153
    %2137 = vmatpush.bf16.msra.mxu0 %v1149
    %2138 = vmatpush.bf16.msra.mxu0 %v1145
    %2139 = vmatpush.bf16.msra.mxu0 %v1141
    %2140 = vmatpush.bf16.msra.mxu0 %v1137
    %2141 = vmatmul.bf16.gmra.mxu0 %v157
    %v2142 = vpop.f32.mrf.mxu0
    %v2143 = vadd.f32 %v2114, %v2142
    %v2144 = vpop.f32.mrf.mxu0
    %v2145 = vadd.f32 %v2116, %v2144
    %2146 = vmatmul.bf16.gmra.mxu0 %v164
    %v2147 = vpop.f32.mrf.mxu0
    %v2148 = vadd.f32 %v2119, %v2147
    %v2149 = vpop.f32.mrf.mxu0
    %v2150 = vadd.f32 %v2121, %v2149
    %2151 = vmatmul.bf16.gmra.mxu0 %v171
    %v2152 = vpop.f32.mrf.mxu0
    %v2153 = vadd.f32 %v2124, %v2152
    %v2154 = vpop.f32.mrf.mxu0
    %v2155 = vadd.f32 %v2126, %v2154
    %2156 = vmatmul.bf16.gmra.mxu0 %v178
    %v2157 = vpop.f32.mrf.mxu0
    %v2158 = vadd.f32 %v2129, %v2157
    %v2159 = vpop.f32.mrf.mxu0
    %v2160 = vadd.f32 %v2131, %v2159
    %2161 = vdwg.mxu0
    %2162 = vmatpush.bf16.msra.mxu0 0
    %2163 = vmatpush.bf16.msra.mxu0 0
    %2164 = vmatpush.bf16.msra.mxu0 0
    %2165 = vmatpush.bf16.msra.mxu0 0
    %2166 = vmatpush.bf16.msra.mxu0 0
    %2167 = vmatpush.bf16.msra.mxu0 0
    %2168 = vmatpush.bf16.msra.mxu0 0
    %2169 = vmatpush.bf16.msra.mxu0 %v1169
    %2170 = vmatmul.bf16.gmra.mxu0 %v1368
    %v2171 = vpop.f32.mrf.mxu0
    %v2172 = vadd.f32 %v2143, %v2171
    %v2173 = vpop.f32.mrf.mxu0
    %v2174 = vadd.f32 %v2145, %v2173
    %2175 = vmatmul.bf16.gmra.mxu0 %v1371
    %v2176 = vpop.f32.mrf.mxu0
    %v2177 = vadd.f32 %v2148, %v2176
    %v2178 = vpop.f32.mrf.mxu0
    %v2179 = vadd.f32 %v2150, %v2178
    %2180 = vmatmul.bf16.gmra.mxu0 %v1374
    %v2181 = vpop.f32.mrf.mxu0
    %v2182 = vadd.f32 %v2153, %v2181
    %v2183 = vpop.f32.mrf.mxu0
    %v2184 = vadd.f32 %v2155, %v2183
    %2185 = vmatmul.bf16.gmra.mxu0 %v1377
    %v2186 = vpop.f32.mrf.mxu0
    %v2187 = vadd.f32 %v2158, %v2186
    %v2188 = vpop.f32.mrf.mxu0
    %v2189 = vadd.f32 %v2160, %v2188
    %2190 = vdwg.mxu0
    %s2191 = smul.u32 4, 64
    %s2192 = smul.u32 %s2191, 2
    %s2193 = sshll.u32 %s2192, 4
    %2194 = dma.done [#allocation4], %s2193
    %v2195 = vpack.c.bf16 %v1565, %v1563
    %v2196 = vpack.c.bf16 %v1768, %v1766
    %v2197 = vpack.c.bf16 %v1971, %v1969
    %v2198 = vpack.c.bf16 %v2174, %v2172
    %v2199 = vpack.c.bf16 %v1570, %v1568
    %v2200 = vpack.c.bf16 %v1773, %v1771
    %v2201 = vpack.c.bf16 %v1976, %v1974
    %v2202 = vpack.c.bf16 %v2179, %v2177
    %v2203 = vpack.c.bf16 %v1575, %v1573
    %v2204 = vpack.c.bf16 %v1778, %v1776
    %v2205 = vpack.c.bf16 %v1981, %v1979
    %v2206 = vpack.c.bf16 %v2184, %v2182
    %v2207 = vpack.c.bf16 %v1580, %v1578
    %v2208 = vpack.c.bf16 %v1783, %v1781
    %v2209 = vpack.c.bf16 %v1986, %v1984
    %v2210 = vpack.c.bf16 %v2189, %v2187
    %v2211 = vld [vmem:[#allocation2] sm:$0xff]
    %v2212 = vld [vmem:[#allocation2 + $0x8] sm:$0xff]
    %v2213 = vld [vmem:[#allocation2 + $0x10] sm:$0xff]
    %v2214 = vld [vmem:[#allocation2 + $0x18] sm:$0xff]
    %v2215 = vld [vmem:[#allocation2 + $0x20] sm:$0xff]
    %v2216 = vld [vmem:[#allocation2 + $0x28] sm:$0xff]
    %v2217 = vld [vmem:[#allocation2 + $0x30] sm:$0xff]
    %v2218 = vld [vmem:[#allocation2 + $0x38] sm:$0xff]
    %v2219 = vld [vmem:[#allocation2 + $0x40] sm:$0xff]
    %v2220 = vld [vmem:[#allocation2 + $0x48] sm:$0xff]
    %v2221 = vld [vmem:[#allocation2 + $0x50] sm:$0xff]
    %v2222 = vld [vmem:[#allocation2 + $0x58] sm:$0xff]
    %v2223 = vld [vmem:[#allocation2 + $0x60] sm:$0xff]
    %v2224 = vld [vmem:[#allocation2 + $0x68] sm:$0xff]
    %v2225 = vld [vmem:[#allocation2 + $0x70] sm:$0xff]
    %v2226 = vld [vmem:[#allocation2 + $0x78] sm:$0xff]
    %v2227 = vld [vmem:[#allocation2 + $0x80] sm:$0xff]
    %v2228 = vld [vmem:[#allocation2 + $0x88] sm:$0xff]
    %v2229 = vld [vmem:[#allocation2 + $0x90] sm:$0xff]
    %v2230 = vld [vmem:[#allocation2 + $0x98] sm:$0xff]
    %v2231 = vld [vmem:[#allocation2 + $0xa0] sm:$0xff]
    %v2232 = vld [vmem:[#allocation2 + $0xa8] sm:$0xff]
    %v2233 = vld [vmem:[#allocation2 + $0xb0] sm:$0xff]
    %v2234 = vld [vmem:[#allocation2 + $0xb8] sm:$0xff]
    %v2235 = vld [vmem:[#allocation2 + $0xc0] sm:$0xff]
    %v2236 = vld [vmem:[#allocation2 + $0xc8] sm:$0xff]
    %v2237 = vld [vmem:[#allocation2 + $0xd0] sm:$0xff]
    %v2238 = vld [vmem:[#allocation2 + $0xd8] sm:$0xff]
    %v2239 = vld [vmem:[#allocation2 + $0xe0] sm:$0xff]
    %v2240 = vld [vmem:[#allocation2 + $0xe8] sm:$0xff]
    %v2241 = vld [vmem:[#allocation2 + $0xf0] sm:$0xff]
    %v2242 = vld [vmem:[#allocation2 + $0xf8] sm:$0xff]
    %v2243 = vld [vmem:[#allocation2 + $0x100] sm:$0xff]
    %v2244 = vld [vmem:[#allocation2 + $0x108] sm:$0xff]
    %v2245 = vld [vmem:[#allocation2 + $0x110] sm:$0xff]
    %v2246 = vld [vmem:[#allocation2 + $0x118] sm:$0xff]
    %v2247 = vld [vmem:[#allocation2 + $0x120] sm:$0xff]
    %v2248 = vld [vmem:[#allocation2 + $0x128] sm:$0xff]
    %v2249 = vld [vmem:[#allocation2 + $0x130] sm:$0xff]
    %v2250 = vld [vmem:[#allocation2 + $0x138] sm:$0xff]
    %v2251 = vld [vmem:[#allocation2 + $0x140] sm:$0xff]
    %v2252 = vld [vmem:[#allocation2 + $0x148] sm:$0xff]
    %v2253 = vld [vmem:[#allocation2 + $0x150] sm:$0xff]
    %v2254 = vld [vmem:[#allocation2 + $0x158] sm:$0xff]
    %v2255 = vld [vmem:[#allocation2 + $0x160] sm:$0xff]
    %v2256 = vld [vmem:[#allocation2 + $0x168] sm:$0xff]
    %v2257 = vld [vmem:[#allocation2 + $0x170] sm:$0xff]
    %v2258 = vld [vmem:[#allocation2 + $0x178] sm:$0xff]
    %v2259 = vld [vmem:[#allocation2 + $0x180] sm:$0xff]
    %v2260 = vld [vmem:[#allocation2 + $0x188] sm:$0xff]
    %v2261 = vld [vmem:[#allocation2 + $0x190] sm:$0xff]
    %v2262 = vld [vmem:[#allocation2 + $0x198] sm:$0xff]
    %v2263 = vld [vmem:[#allocation2 + $0x1a0] sm:$0xff]
    %v2264 = vld [vmem:[#allocation2 + $0x1a8] sm:$0xff]
    %v2265 = vld [vmem:[#allocation2 + $0x1b0] sm:$0xff]
    %v2266 = vld [vmem:[#allocation2 + $0x1b8] sm:$0xff]
    %v2267 = vld [vmem:[#allocation2 + $0x1c0] sm:$0xff]
    %v2268 = vld [vmem:[#allocation2 + $0x1c8] sm:$0xff]
    %v2269 = vld [vmem:[#allocation2 + $0x1d0] sm:$0xff]
    %v2270 = vld [vmem:[#allocation2 + $0x1d8] sm:$0xff]
    %v2271 = vld [vmem:[#allocation2 + $0x1e0] sm:$0xff]
    %v2272 = vld [vmem:[#allocation2 + $0x1e8] sm:$0xff]
    %v2273 = vld [vmem:[#allocation2 + $0x1f0] sm:$0xff]
    %v2274 = vld [vmem:[#allocation2 + $0x1f8] sm:$0xff]
    %v2275 = vld [vmem:[%s4] sm:$0x3]
    %v2277 = vperm.slane %v2275, 0
    %v2278 = vperm.slane %v2275, 1
    %v2345 = vunpack.c.l.b16 %v2211
    %v2346 = vunpack.c.h.b16 %v2211
    %v2347 = vunpack.c.l.b16 %v2212
    %v2348 = vunpack.c.h.b16 %v2212
    %v2349 = vunpack.c.l.b16 %v2213
    %v2350 = vunpack.c.h.b16 %v2213
    %v2351 = vunpack.c.l.b16 %v2214
    %v2352 = vunpack.c.h.b16 %v2214
    %v2353 = vunpack.c.l.b16 %v2215
    %v2354 = vunpack.c.h.b16 %v2215
    %v2355 = vunpack.c.l.b16 %v2216
    %v2356 = vunpack.c.h.b16 %v2216
    %v2357 = vunpack.c.l.b16 %v2217
    %v2358 = vunpack.c.h.b16 %v2217
    %v2359 = vunpack.c.l.b16 %v2218
    %v2360 = vunpack.c.h.b16 %v2218
    %v2361 = vunpack.c.l.b16 %v2219
    %v2362 = vunpack.c.h.b16 %v2219
    %v2363 = vunpack.c.l.b16 %v2220
    %v2364 = vunpack.c.h.b16 %v2220
    %v2365 = vunpack.c.l.b16 %v2221
    %v2366 = vunpack.c.h.b16 %v2221
    %v2367 = vunpack.c.l.b16 %v2222
    %v2368 = vunpack.c.h.b16 %v2222
    %v2369 = vunpack.c.l.b16 %v2223
    %v2370 = vunpack.c.h.b16 %v2223
    %v2371 = vunpack.c.l.b16 %v2224
    %v2372 = vunpack.c.h.b16 %v2224
    %v2373 = vunpack.c.l.b16 %v2225
    %v2374 = vunpack.c.h.b16 %v2225
    %v2375 = vunpack.c.l.b16 %v2226
    %v2376 = vunpack.c.h.b16 %v2226
    %v2377 = vunpack.c.l.b16 %v2227
    %v2378 = vunpack.c.h.b16 %v2227
    %v2379 = vunpack.c.l.b16 %v2228
    %v2380 = vunpack.c.h.b16 %v2228
    %v2381 = vunpack.c.l.b16 %v2229
    %v2382 = vunpack.c.h.b16 %v2229
    %v2383 = vunpack.c.l.b16 %v2230
    %v2384 = vunpack.c.h.b16 %v2230
    %v2385 = vunpack.c.l.b16 %v2231
    %v2386 = vunpack.c.h.b16 %v2231
    %v2387 = vunpack.c.l.b16 %v2232
    %v2388 = vunpack.c.h.b16 %v2232
    %v2389 = vunpack.c.l.b16 %v2233
    %v2390 = vunpack.c.h.b16 %v2233
    %v2391 = vunpack.c.l.b16 %v2234
    %v2392 = vunpack.c.h.b16 %v2234
    %v2393 = vunpack.c.l.b16 %v2235
    %v2394 = vunpack.c.h.b16 %v2235
    %v2395 = vunpack.c.l.b16 %v2236
    %v2396 = vunpack.c.h.b16 %v2236
    %v2397 = vunpack.c.l.b16 %v2237
    %v2398 = vunpack.c.h.b16 %v2237
    %v2399 = vunpack.c.l.b16 %v2238
    %v2400 = vunpack.c.h.b16 %v2238
    %v2401 = vunpack.c.l.b16 %v2239
    %v2402 = vunpack.c.h.b16 %v2239
    %v2403 = vunpack.c.l.b16 %v2240
    %v2404 = vunpack.c.h.b16 %v2240
    %v2405 = vunpack.c.l.b16 %v2241
    %v2406 = vunpack.c.h.b16 %v2241
    %v2407 = vunpack.c.l.b16 %v2242
    %v2408 = vunpack.c.h.b16 %v2242
    %v2409 = vunpack.c.l.b16 %v2243
    %v2410 = vunpack.c.h.b16 %v2243
    %v2411 = vunpack.c.l.b16 %v2244
    %v2412 = vunpack.c.h.b16 %v2244
    %v2413 = vunpack.c.l.b16 %v2245
    %v2414 = vunpack.c.h.b16 %v2245
    %v2415 = vunpack.c.l.b16 %v2246
    %v2416 = vunpack.c.h.b16 %v2246
    %v2417 = vunpack.c.l.b16 %v2247
    %v2418 = vunpack.c.h.b16 %v2247
    %v2419 = vunpack.c.l.b16 %v2248
    %v2420 = vunpack.c.h.b16 %v2248
    %v2421 = vunpack.c.l.b16 %v2249
    %v2422 = vunpack.c.h.b16 %v2249
    %v2423 = vunpack.c.l.b16 %v2250
    %v2424 = vunpack.c.h.b16 %v2250
    %v2425 = vunpack.c.l.b16 %v2251
    %v2426 = vunpack.c.h.b16 %v2251
    %v2427 = vunpack.c.l.b16 %v2252
    %v2428 = vunpack.c.h.b16 %v2252
    %v2429 = vunpack.c.l.b16 %v2253
    %v2430 = vunpack.c.h.b16 %v2253
    %v2431 = vunpack.c.l.b16 %v2254
    %v2432 = vunpack.c.h.b16 %v2254
    %v2433 = vunpack.c.l.b16 %v2255
    %v2434 = vunpack.c.h.b16 %v2255
    %v2435 = vunpack.c.l.b16 %v2256
    %v2436 = vunpack.c.h.b16 %v2256
    %v2437 = vunpack.c.l.b16 %v2257
    %v2438 = vunpack.c.h.b16 %v2257
    %v2439 = vunpack.c.l.b16 %v2258
    %v2440 = vunpack.c.h.b16 %v2258
    %v2441 = vunpack.c.l.b16 %v2259
    %v2442 = vunpack.c.h.b16 %v2259
    %v2443 = vunpack.c.l.b16 %v2260
    %v2444 = vunpack.c.h.b16 %v2260
    %v2445 = vunpack.c.l.b16 %v2261
    %v2446 = vunpack.c.h.b16 %v2261
    %v2447 = vunpack.c.l.b16 %v2262
    %v2448 = vunpack.c.h.b16 %v2262
    %v2449 = vunpack.c.l.b16 %v2263
    %v2450 = vunpack.c.h.b16 %v2263
    %v2451 = vunpack.c.l.b16 %v2264
    %v2452 = vunpack.c.h.b16 %v2264
    %v2453 = vunpack.c.l.b16 %v2265
    %v2454 = vunpack.c.h.b16 %v2265
    %v2455 = vunpack.c.l.b16 %v2266
    %v2456 = vunpack.c.h.b16 %v2266
    %v2457 = vunpack.c.l.b16 %v2267
    %v2458 = vunpack.c.h.b16 %v2267
    %v2459 = vunpack.c.l.b16 %v2268
    %v2460 = vunpack.c.h.b16 %v2268
    %v2461 = vunpack.c.l.b16 %v2269
    %v2462 = vunpack.c.h.b16 %v2269
    %v2463 = vunpack.c.l.b16 %v2270
    %v2464 = vunpack.c.h.b16 %v2270
    %v2465 = vunpack.c.l.b16 %v2271
    %v2466 = vunpack.c.h.b16 %v2271
    %v2467 = vunpack.c.l.b16 %v2272
    %v2468 = vunpack.c.h.b16 %v2272
    %v2469 = vunpack.c.l.b16 %v2273
    %v2470 = vunpack.c.h.b16 %v2273
    %v2471 = vunpack.c.l.b16 %v2274
    %v2472 = vunpack.c.h.b16 %v2274
    %v2473 = vpack.c.b16 %v2347, %v2345
    %v2474 = vpack.c.b16 %v2348, %v2346
    %v2475 = vpack.c.b16 %v2351, %v2349
    %v2476 = vpack.c.b16 %v2352, %v2350
    %v2477 = vpack.c.b16 %v2355, %v2353
    %v2478 = vpack.c.b16 %v2356, %v2354
    %v2479 = vpack.c.b16 %v2359, %v2357
    %v2480 = vpack.c.b16 %v2360, %v2358
    %v2481 = vpack.c.b16 %v2363, %v2361
    %v2482 = vpack.c.b16 %v2364, %v2362
    %v2483 = vpack.c.b16 %v2367, %v2365
    %v2484 = vpack.c.b16 %v2368, %v2366
    %v2485 = vpack.c.b16 %v2371, %v2369
    %v2486 = vpack.c.b16 %v2372, %v2370
    %v2487 = vpack.c.b16 %v2375, %v2373
    %v2488 = vpack.c.b16 %v2376, %v2374
    %v2489 = vpack.c.b16 %v2379, %v2377
    %v2490 = vpack.c.b16 %v2380, %v2378
    %v2491 = vpack.c.b16 %v2383, %v2381
    %v2492 = vpack.c.b16 %v2384, %v2382
    %v2493 = vpack.c.b16 %v2387, %v2385
    %v2494 = vpack.c.b16 %v2388, %v2386
    %v2495 = vpack.c.b16 %v2391, %v2389
    %v2496 = vpack.c.b16 %v2392, %v2390
    %v2497 = vpack.c.b16 %v2395, %v2393
    %v2498 = vpack.c.b16 %v2396, %v2394
    %v2499 = vpack.c.b16 %v2399, %v2397
    %v2500 = vpack.c.b16 %v2400, %v2398
    %v2501 = vpack.c.b16 %v2403, %v2401
    %v2502 = vpack.c.b16 %v2404, %v2402
    %v2503 = vpack.c.b16 %v2407, %v2405
    %v2504 = vpack.c.b16 %v2408, %v2406
    %v2505 = vpack.c.b16 %v2411, %v2409
    %v2506 = vpack.c.b16 %v2412, %v2410
    %v2507 = vpack.c.b16 %v2415, %v2413
    %v2508 = vpack.c.b16 %v2416, %v2414
    %v2509 = vpack.c.b16 %v2419, %v2417
    %v2510 = vpack.c.b16 %v2420, %v2418
    %v2511 = vpack.c.b16 %v2423, %v2421
    %v2512 = vpack.c.b16 %v2424, %v2422
    %v2513 = vpack.c.b16 %v2427, %v2425
    %v2514 = vpack.c.b16 %v2428, %v2426
    %v2515 = vpack.c.b16 %v2431, %v2429
    %v2516 = vpack.c.b16 %v2432, %v2430
    %v2517 = vpack.c.b16 %v2435, %v2433
    %v2518 = vpack.c.b16 %v2436, %v2434
    %v2519 = vpack.c.b16 %v2439, %v2437
    %v2520 = vpack.c.b16 %v2440, %v2438
    %v2521 = vpack.c.b16 %v2443, %v2441
    %v2522 = vpack.c.b16 %v2444, %v2442
    %v2523 = vpack.c.b16 %v2447, %v2445
    %v2524 = vpack.c.b16 %v2448, %v2446
    %v2525 = vpack.c.b16 %v2451, %v2449
    %v2526 = vpack.c.b16 %v2452, %v2450
    %v2527 = vpack.c.b16 %v2455, %v2453
    %v2528 = vpack.c.b16 %v2456, %v2454
    %v2529 = vpack.c.b16 %v2459, %v2457
    %v2530 = vpack.c.b16 %v2460, %v2458
    %v2531 = vpack.c.b16 %v2463, %v2461
    %v2532 = vpack.c.b16 %v2464, %v2462
    %v2533 = vpack.c.b16 %v2467, %v2465
    %v2534 = vpack.c.b16 %v2468, %v2466
    %v2535 = vpack.c.b16 %v2471, %v2469
    %v2536 = vpack.c.b16 %v2472, %v2470
    %2601 = vmatpush.bf16.msra.mxu0 %v2487
    %2602 = vmatpush.bf16.msra.mxu0 %v2485
    %2603 = vmatpush.bf16.msra.mxu0 %v2483
    %2604 = vmatpush.bf16.msra.mxu0 %v2481
    %2605 = vmatpush.bf16.msra.mxu0 %v2479
    %2606 = vmatpush.bf16.msra.mxu0 %v2477
    %2607 = vmatpush.bf16.msra.mxu0 %v2475
    %2608 = vmatpush.bf16.msra.mxu0 %v2473
    %2609 = vmatmul.bf16.gmra.mxu0 %v2195
    %v2610 = vpop.f32.mrf.mxu0
    %v2611 = vadd.f32 %v2277, %v2610
    %v2612 = vpop.f32.mrf.mxu0
    %v2613 = vadd.f32 %v2277, %v2612
    %2614 = vmatmul.bf16.gmra.mxu0 %v2199
    %v2615 = vpop.f32.mrf.mxu0
    %v2616 = vadd.f32 %v2277, %v2615
    %v2617 = vpop.f32.mrf.mxu0
    %v2618 = vadd.f32 %v2277, %v2617
    %2619 = vmatmul.bf16.gmra.mxu0 %v2203
    %v2620 = vpop.f32.mrf.mxu0
    %v2621 = vadd.f32 %v2277, %v2620
    %v2622 = vpop.f32.mrf.mxu0
    %v2623 = vadd.f32 %v2277, %v2622
    %2624 = vmatmul.bf16.gmra.mxu0 %v2207
    %v2625 = vpop.f32.mrf.mxu0
    %v2626 = vadd.f32 %v2277, %v2625
    %v2627 = vpop.f32.mrf.mxu0
    %v2628 = vadd.f32 %v2277, %v2627
    %2629 = vdwg.mxu0
    %2630 = vmatpush.bf16.msra.mxu0 %v2503
    %2631 = vmatpush.bf16.msra.mxu0 %v2501
    %2632 = vmatpush.bf16.msra.mxu0 %v2499
    %2633 = vmatpush.bf16.msra.mxu0 %v2497
    %2634 = vmatpush.bf16.msra.mxu0 %v2495
    %2635 = vmatpush.bf16.msra.mxu0 %v2493
    %2636 = vmatpush.bf16.msra.mxu0 %v2491
    %2637 = vmatpush.bf16.msra.mxu0 %v2489
    %2638 = vmatmul.bf16.gmra.mxu0 %v2196
    %v2639 = vpop.f32.mrf.mxu0
    %v2640 = vadd.f32 %v2611, %v2639
    %v2641 = vpop.f32.mrf.mxu0
    %v2642 = vadd.f32 %v2613, %v2641
    %2643 = vmatmul.bf16.gmra.mxu0 %v2200
    %v2644 = vpop.f32.mrf.mxu0
    %v2645 = vadd.f32 %v2616, %v2644
    %v2646 = vpop.f32.mrf.mxu0
    %v2647 = vadd.f32 %v2618, %v2646
    %2648 = vmatmul.bf16.gmra.mxu0 %v2204
    %v2649 = vpop.f32.mrf.mxu0
    %v2650 = vadd.f32 %v2621, %v2649
    %v2651 = vpop.f32.mrf.mxu0
    %v2652 = vadd.f32 %v2623, %v2651
    %2653 = vmatmul.bf16.gmra.mxu0 %v2208
    %v2654 = vpop.f32.mrf.mxu0
    %v2655 = vadd.f32 %v2626, %v2654
    %v2656 = vpop.f32.mrf.mxu0
    %v2657 = vadd.f32 %v2628, %v2656
    %2658 = vdwg.mxu0
    %2659 = vmatpush.bf16.msra.mxu0 %v2519
    %2660 = vmatpush.bf16.msra.mxu0 %v2517
    %2661 = vmatpush.bf16.msra.mxu0 %v2515
    %2662 = vmatpush.bf16.msra.mxu0 %v2513
    %2663 = vmatpush.bf16.msra.mxu0 %v2511
    %2664 = vmatpush.bf16.msra.mxu0 %v2509
    %2665 = vmatpush.bf16.msra.mxu0 %v2507
    %2666 = vmatpush.bf16.msra.mxu0 %v2505
    %2667 = vmatmul.bf16.gmra.mxu0 %v2197
    %v2668 = vpop.f32.mrf.mxu0
    %v2669 = vadd.f32 %v2640, %v2668
    %v2670 = vpop.f32.mrf.mxu0
    %v2671 = vadd.f32 %v2642, %v2670
    %2672 = vmatmul.bf16.gmra.mxu0 %v2201
    %v2673 = vpop.f32.mrf.mxu0
    %v2674 = vadd.f32 %v2645, %v2673
    %v2675 = vpop.f32.mrf.mxu0
    %v2676 = vadd.f32 %v2647, %v2675
    %2677 = vmatmul.bf16.gmra.mxu0 %v2205
    %v2678 = vpop.f32.mrf.mxu0
    %v2679 = vadd.f32 %v2650, %v2678
    %v2680 = vpop.f32.mrf.mxu0
    %v2681 = vadd.f32 %v2652, %v2680
    %2682 = vmatmul.bf16.gmra.mxu0 %v2209
    %v2683 = vpop.f32.mrf.mxu0
    %v2684 = vadd.f32 %v2655, %v2683
    %v2685 = vpop.f32.mrf.mxu0
    %v2686 = vadd.f32 %v2657, %v2685
    %2687 = vdwg.mxu0
    %2688 = vmatpush.bf16.msra.mxu0 %v2535
    %2689 = vmatpush.bf16.msra.mxu0 %v2533
    %2690 = vmatpush.bf16.msra.mxu0 %v2531
    %2691 = vmatpush.bf16.msra.mxu0 %v2529
    %2692 = vmatpush.bf16.msra.mxu0 %v2527
    %2693 = vmatpush.bf16.msra.mxu0 %v2525
    %2694 = vmatpush.bf16.msra.mxu0 %v2523
    %2695 = vmatpush.bf16.msra.mxu0 %v2521
    %2696 = vmatmul.bf16.gmra.mxu0 %v2198
    %v2697 = vpop.f32.mrf.mxu0
    %v2698 = vadd.f32 %v2669, %v2697
    %v2699 = vpop.f32.mrf.mxu0
    %v2700 = vadd.f32 %v2671, %v2699
    %2701 = vmatmul.bf16.gmra.mxu0 %v2202
    %v2702 = vpop.f32.mrf.mxu0
    %v2703 = vadd.f32 %v2674, %v2702
    %v2704 = vpop.f32.mrf.mxu0
    %v2705 = vadd.f32 %v2676, %v2704
    %2706 = vmatmul.bf16.gmra.mxu0 %v2206
    %v2707 = vpop.f32.mrf.mxu0
    %v2708 = vadd.f32 %v2679, %v2707
    %v2709 = vpop.f32.mrf.mxu0
    %v2710 = vadd.f32 %v2681, %v2709
    %2711 = vmatmul.bf16.gmra.mxu0 %v2210
    %v2712 = vpop.f32.mrf.mxu0
    %v2713 = vadd.f32 %v2684, %v2712
    %v2714 = vpop.f32.mrf.mxu0
    %v2715 = vadd.f32 %v2686, %v2714
    %2716 = vdwg.mxu0
    %2717 = vmatpush.bf16.msra.mxu0 %v2488
    %2718 = vmatpush.bf16.msra.mxu0 %v2486
    %2719 = vmatpush.bf16.msra.mxu0 %v2484
    %2720 = vmatpush.bf16.msra.mxu0 %v2482
    %2721 = vmatpush.bf16.msra.mxu0 %v2480
    %2722 = vmatpush.bf16.msra.mxu0 %v2478
    %2723 = vmatpush.bf16.msra.mxu0 %v2476
    %2724 = vmatpush.bf16.msra.mxu0 %v2474
    %2725 = vmatmul.bf16.gmra.mxu0 %v2195
    %v2726 = vpop.f32.mrf.mxu0
    %v2727 = vadd.f32 %v2278, %v2726
    %v2728 = vpop.f32.mrf.mxu0
    %v2729 = vadd.f32 %v2278, %v2728
    %2730 = vmatmul.bf16.gmra.mxu0 %v2199
    %v2731 = vpop.f32.mrf.mxu0
    %v2732 = vadd.f32 %v2278, %v2731
    %v2733 = vpop.f32.mrf.mxu0
    %v2734 = vadd.f32 %v2278, %v2733
    %2735 = vmatmul.bf16.gmra.mxu0 %v2203
    %v2736 = vpop.f32.mrf.mxu0
    %v2737 = vadd.f32 %v2278, %v2736
    %v2738 = vpop.f32.mrf.mxu0
    %v2739 = vadd.f32 %v2278, %v2738
    %2740 = vmatmul.bf16.gmra.mxu0 %v2207
    %v2741 = vpop.f32.mrf.mxu0
    %v2742 = vadd.f32 %v2278, %v2741
    %v2743 = vpop.f32.mrf.mxu0
    %v2744 = vadd.f32 %v2278, %v2743
    %2745 = vdwg.mxu0
    %2746 = vmatpush.bf16.msra.mxu0 %v2504
    %2747 = vmatpush.bf16.msra.mxu0 %v2502
    %2748 = vmatpush.bf16.msra.mxu0 %v2500
    %2749 = vmatpush.bf16.msra.mxu0 %v2498
    %2750 = vmatpush.bf16.msra.mxu0 %v2496
    %2751 = vmatpush.bf16.msra.mxu0 %v2494
    %2752 = vmatpush.bf16.msra.mxu0 %v2492
    %2753 = vmatpush.bf16.msra.mxu0 %v2490
    %2754 = vmatmul.bf16.gmra.mxu0 %v2196
    %v2755 = vpop.f32.mrf.mxu0
    %v2756 = vadd.f32 %v2727, %v2755
    %v2757 = vpop.f32.mrf.mxu0
    %v2758 = vadd.f32 %v2729, %v2757
    %2759 = vmatmul.bf16.gmra.mxu0 %v2200
    %v2760 = vpop.f32.mrf.mxu0
    %v2761 = vadd.f32 %v2732, %v2760
    %v2762 = vpop.f32.mrf.mxu0
    %v2763 = vadd.f32 %v2734, %v2762
    %2764 = vmatmul.bf16.gmra.mxu0 %v2204
    %v2765 = vpop.f32.mrf.mxu0
    %v2766 = vadd.f32 %v2737, %v2765
    %v2767 = vpop.f32.mrf.mxu0
    %v2768 = vadd.f32 %v2739, %v2767
    %2769 = vmatmul.bf16.gmra.mxu0 %v2208
    %v2770 = vpop.f32.mrf.mxu0
    %v2771 = vadd.f32 %v2742, %v2770
    %v2772 = vpop.f32.mrf.mxu0
    %v2773 = vadd.f32 %v2744, %v2772
    %2774 = vdwg.mxu0
    %2775 = vmatpush.bf16.msra.mxu0 %v2520
    %2776 = vmatpush.bf16.msra.mxu0 %v2518
    %2777 = vmatpush.bf16.msra.mxu0 %v2516
    %2778 = vmatpush.bf16.msra.mxu0 %v2514
    %2779 = vmatpush.bf16.msra.mxu0 %v2512
    %2780 = vmatpush.bf16.msra.mxu0 %v2510
    %2781 = vmatpush.bf16.msra.mxu0 %v2508
    %2782 = vmatpush.bf16.msra.mxu0 %v2506
    %2783 = vmatmul.bf16.gmra.mxu0 %v2197
    %v2784 = vpop.f32.mrf.mxu0
    %v2785 = vadd.f32 %v2756, %v2784
    %v2786 = vpop.f32.mrf.mxu0
    %v2787 = vadd.f32 %v2758, %v2786
    %2788 = vmatmul.bf16.gmra.mxu0 %v2201
    %v2789 = vpop.f32.mrf.mxu0
    %v2790 = vadd.f32 %v2761, %v2789
    %v2791 = vpop.f32.mrf.mxu0
    %v2792 = vadd.f32 %v2763, %v2791
    %2793 = vmatmul.bf16.gmra.mxu0 %v2205
    %v2794 = vpop.f32.mrf.mxu0
    %v2795 = vadd.f32 %v2766, %v2794
    %v2796 = vpop.f32.mrf.mxu0
    %v2797 = vadd.f32 %v2768, %v2796
    %2798 = vmatmul.bf16.gmra.mxu0 %v2209
    %v2799 = vpop.f32.mrf.mxu0
    %v2800 = vadd.f32 %v2771, %v2799
    %v2801 = vpop.f32.mrf.mxu0
    %v2802 = vadd.f32 %v2773, %v2801
    %2803 = vdwg.mxu0
    %2804 = vmatpush.bf16.msra.mxu0 %v2536
    %2805 = vmatpush.bf16.msra.mxu0 %v2534
    %2806 = vmatpush.bf16.msra.mxu0 %v2532
    %2807 = vmatpush.bf16.msra.mxu0 %v2530
    %2808 = vmatpush.bf16.msra.mxu0 %v2528
    %2809 = vmatpush.bf16.msra.mxu0 %v2526
    %2810 = vmatpush.bf16.msra.mxu0 %v2524
    %2811 = vmatpush.bf16.msra.mxu0 %v2522
    %2812 = vmatmul.bf16.gmra.mxu0 %v2198
    %v2813 = vpop.f32.mrf.mxu0
    %v2814 = vadd.f32 %v2785, %v2813
    %v2815 = vpop.f32.mrf.mxu0
    %v2816 = vadd.f32 %v2787, %v2815
    %2817 = vmatmul.bf16.gmra.mxu0 %v2202
    %v2818 = vpop.f32.mrf.mxu0
    %v2819 = vadd.f32 %v2790, %v2818
    %v2820 = vpop.f32.mrf.mxu0
    %v2821 = vadd.f32 %v2792, %v2820
    %2822 = vmatmul.bf16.gmra.mxu0 %v2206
    %v2823 = vpop.f32.mrf.mxu0
    %v2824 = vadd.f32 %v2795, %v2823
    %v2825 = vpop.f32.mrf.mxu0
    %v2826 = vadd.f32 %v2797, %v2825
    %2827 = vmatmul.bf16.gmra.mxu0 %v2210
    %v2828 = vpop.f32.mrf.mxu0
    %v2829 = vadd.f32 %v2800, %v2828
    %v2830 = vpop.f32.mrf.mxu0
    %v2831 = vadd.f32 %v2802, %v2830
    %2832 = vdwg.mxu0
    %s2833 = smul.u32 4, 32
    %s2834 = smul.u32 %s2833, 1
    %s2835 = sshll.u32 %s2834, 4
    %2836 = dma.done %s82, %s2835
    %v2837 = vpack.c.bf16 %v2700, %v2698
    %v2838 = vpack.c.bf16 %v2816, %v2814
    %v2839 = vpack.c.bf16 %v2705, %v2703
    %v2840 = vpack.c.bf16 %v2821, %v2819
    %v2841 = vpack.c.bf16 %v2710, %v2708
    %v2842 = vpack.c.bf16 %v2826, %v2824
    %v2843 = vpack.c.bf16 %v2715, %v2713
    %v2844 = vpack.c.bf16 %v2831, %v2829
    %v2845 = vld [vmem:[#allocation3] sm:$0xf]
    %v2846 = vld [vmem:[#allocation3 + $0x4] sm:$0xf]
    %v2847 = vld [vmem:[#allocation3 + $0x8] sm:$0xf]
    %v2848 = vld [vmem:[#allocation3 + $0xc] sm:$0xf]
    %v2849 = vld [vmem:[#allocation3 + $0x10] sm:$0xf]
    %v2850 = vld [vmem:[#allocation3 + $0x14] sm:$0xf]
    %v2851 = vld [vmem:[#allocation3 + $0x18] sm:$0xf]
    %v2852 = vld [vmem:[#allocation3 + $0x1c] sm:$0xf]
    %v2853 = vld [vmem:[#allocation3 + $0x20] sm:$0xf]
    %v2854 = vld [vmem:[#allocation3 + $0x24] sm:$0xf]
    %v2855 = vld [vmem:[#allocation3 + $0x28] sm:$0xf]
    %v2856 = vld [vmem:[#allocation3 + $0x2c] sm:$0xf]
    %v2857 = vld [vmem:[#allocation3 + $0x30] sm:$0xf]
    %v2858 = vld [vmem:[#allocation3 + $0x34] sm:$0xf]
    %v2859 = vld [vmem:[#allocation3 + $0x38] sm:$0xf]
    %v2860 = vld [vmem:[#allocation3 + $0x3c] sm:$0xf]
    %v2861 = vld [vmem:[#allocation3 + $0x40] sm:$0xf]
    %v2862 = vld [vmem:[#allocation3 + $0x44] sm:$0xf]
    %v2863 = vld [vmem:[#allocation3 + $0x48] sm:$0xf]
    %v2864 = vld [vmem:[#allocation3 + $0x4c] sm:$0xf]
    %v2865 = vld [vmem:[#allocation3 + $0x50] sm:$0xf]
    %v2866 = vld [vmem:[#allocation3 + $0x54] sm:$0xf]
    %v2867 = vld [vmem:[#allocation3 + $0x58] sm:$0xf]
    %v2868 = vld [vmem:[#allocation3 + $0x5c] sm:$0xf]
    %v2869 = vld [vmem:[#allocation3 + $0x60] sm:$0xf]
    %v2870 = vld [vmem:[#allocation3 + $0x64] sm:$0xf]
    %v2871 = vld [vmem:[#allocation3 + $0x68] sm:$0xf]
    %v2872 = vld [vmem:[#allocation3 + $0x6c] sm:$0xf]
    %v2873 = vld [vmem:[#allocation3 + $0x70] sm:$0xf]
    %v2874 = vld [vmem:[#allocation3 + $0x74] sm:$0xf]
    %v2875 = vld [vmem:[#allocation3 + $0x78] sm:$0xf]
    %v2876 = vld [vmem:[#allocation3 + $0x7c] sm:$0xf]
    %v2877 = vld [vmem:[%s6] sm:$0x1]
    %v2879 = vperm.slane %v2877, 0
    %v2913 = vunpack.c.l.b16 %v2845
    %v2914 = vunpack.c.l.b16 %v2846
    %v2915 = vunpack.c.l.b16 %v2847
    %v2916 = vunpack.c.l.b16 %v2848
    %v2917 = vunpack.c.l.b16 %v2849
    %v2918 = vunpack.c.l.b16 %v2850
    %v2919 = vunpack.c.l.b16 %v2851
    %v2920 = vunpack.c.l.b16 %v2852
    %v2921 = vunpack.c.l.b16 %v2853
    %v2922 = vunpack.c.l.b16 %v2854
    %v2923 = vunpack.c.l.b16 %v2855
    %v2924 = vunpack.c.l.b16 %v2856
    %v2925 = vunpack.c.l.b16 %v2857
    %v2926 = vunpack.c.l.b16 %v2858
    %v2927 = vunpack.c.l.b16 %v2859
    %v2928 = vunpack.c.l.b16 %v2860
    %v2929 = vunpack.c.l.b16 %v2861
    %v2930 = vunpack.c.l.b16 %v2862
    %v2931 = vunpack.c.l.b16 %v2863
    %v2932 = vunpack.c.l.b16 %v2864
    %v2933 = vunpack.c.l.b16 %v2865
    %v2934 = vunpack.c.l.b16 %v2866
    %v2935 = vunpack.c.l.b16 %v2867
    %v2936 = vunpack.c.l.b16 %v2868
    %v2937 = vunpack.c.l.b16 %v2869
    %v2938 = vunpack.c.l.b16 %v2870
    %v2939 = vunpack.c.l.b16 %v2871
    %v2940 = vunpack.c.l.b16 %v2872
    %v2941 = vunpack.c.l.b16 %v2873
    %v2942 = vunpack.c.l.b16 %v2874
    %v2943 = vunpack.c.l.b16 %v2875
    %v2944 = vunpack.c.l.b16 %v2876
    %v2945 = vpack.c.b16 %v2914, %v2913
    %v2946 = vpack.c.b16 %v2916, %v2915
    %v2947 = vpack.c.b16 %v2918, %v2917
    %v2948 = vpack.c.b16 %v2920, %v2919
    %v2949 = vpack.c.b16 %v2922, %v2921
    %v2950 = vpack.c.b16 %v2924, %v2923
    %v2951 = vpack.c.b16 %v2926, %v2925
    %v2952 = vpack.c.b16 %v2928, %v2927
    %v2953 = vpack.c.b16 %v2930, %v2929
    %v2954 = vpack.c.b16 %v2932, %v2931
    %v2955 = vpack.c.b16 %v2934, %v2933
    %v2956 = vpack.c.b16 %v2936, %v2935
    %v2957 = vpack.c.b16 %v2938, %v2937
    %v2958 = vpack.c.b16 %v2940, %v2939
    %v2959 = vpack.c.b16 %v2942, %v2941
    %v2960 = vpack.c.b16 %v2944, %v2943
    %2977 = vmatpush.bf16.msra.mxu0 %v2952
    %2978 = vmatpush.bf16.msra.mxu0 %v2951
    %2979 = vmatpush.bf16.msra.mxu0 %v2950
    %2980 = vmatpush.bf16.msra.mxu0 %v2949
    %2981 = vmatpush.bf16.msra.mxu0 %v2948
    %2982 = vmatpush.bf16.msra.mxu0 %v2947
    %2983 = vmatpush.bf16.msra.mxu0 %v2946
    %2984 = vmatpush.bf16.msra.mxu0 %v2945
    %2985 = vmatmul.bf16.gmra.mxu0 %v2837
    %v2986 = vpop.f32.mrf.mxu0
    %v2987 = vadd.f32 %v2879, %v2986
    %v2988 = vpop.f32.mrf.mxu0
    %v2989 = vadd.f32 %v2879, %v2988
    %2990 = vmatmul.bf16.gmra.mxu0 %v2839
    %v2991 = vpop.f32.mrf.mxu0
    %v2992 = vadd.f32 %v2879, %v2991
    %v2993 = vpop.f32.mrf.mxu0
    %v2994 = vadd.f32 %v2879, %v2993
    %2995 = vmatmul.bf16.gmra.mxu0 %v2841
    %v2996 = vpop.f32.mrf.mxu0
    %v2997 = vadd.f32 %v2879, %v2996
    %v2998 = vpop.f32.mrf.mxu0
    %v2999 = vadd.f32 %v2879, %v2998
    %3000 = vmatmul.bf16.gmra.mxu0 %v2843
    %v3001 = vpop.f32.mrf.mxu0
    %v3002 = vadd.f32 %v2879, %v3001
    %v3003 = vpop.f32.mrf.mxu0
    %v3004 = vadd.f32 %v2879, %v3003
    %3005 = vdwg.mxu0
    %3006 = vmatpush.bf16.msra.mxu0 %v2960
    %3007 = vmatpush.bf16.msra.mxu0 %v2959
    %3008 = vmatpush.bf16.msra.mxu0 %v2958
    %3009 = vmatpush.bf16.msra.mxu0 %v2957
    %3010 = vmatpush.bf16.msra.mxu0 %v2956
    %3011 = vmatpush.bf16.msra.mxu0 %v2955
    %3012 = vmatpush.bf16.msra.mxu0 %v2954
    %3013 = vmatpush.bf16.msra.mxu0 %v2953
    %3014 = vmatmul.bf16.gmra.mxu0 %v2838
    %v3015 = vpop.f32.mrf.mxu0
    %v3016 = vadd.f32 %v2987, %v3015
    %v3017 = vpop.f32.mrf.mxu0
    %v3018 = vadd.f32 %v2989, %v3017
    %3019 = vmatmul.bf16.gmra.mxu0 %v2840
    %v3020 = vpop.f32.mrf.mxu0
    %v3021 = vadd.f32 %v2992, %v3020
    %v3022 = vpop.f32.mrf.mxu0
    %v3023 = vadd.f32 %v2994, %v3022
    %3024 = vmatmul.bf16.gmra.mxu0 %v2842
    %v3025 = vpop.f32.mrf.mxu0
    %v3026 = vadd.f32 %v2997, %v3025
    %v3027 = vpop.f32.mrf.mxu0
    %v3028 = vadd.f32 %v2999, %v3027
    %3029 = vmatmul.bf16.gmra.mxu0 %v2844
    %v3030 = vpop.f32.mrf.mxu0
    %v3031 = vadd.f32 %v3002, %v3030
    %v3032 = vpop.f32.mrf.mxu0
    %v3033 = vadd.f32 %v3004, %v3032
    %3034 = vdwg.mxu0
    %v3035 = vxor.u32 %v3016, 2147483648
    %v3036 = vxor.u32 %v3018, 2147483648
    %v3037 = vxor.u32 %v3021, 2147483648
    %v3038 = vxor.u32 %v3023, 2147483648
    %v3039 = vxor.u32 %v3026, 2147483648
    %v3040 = vxor.u32 %v3028, 2147483648
    %v3041 = vxor.u32 %v3031, 2147483648
    %v3042 = vxor.u32 %v3033, 2147483648
    %v3043 = vmul.f32 %v3035, 1.442695
    %v3044 = vpow.pop %v3043
    %v3045 = vmul.f32 %v3036, 1.442695
    %v3046 = vpow.pop %v3045
    %v3047 = vmul.f32 %v3037, 1.442695
    %v3048 = vpow.pop %v3047
    %v3049 = vmul.f32 %v3038, 1.442695
    %v3050 = vpow.pop %v3049
    %v3051 = vmul.f32 %v3039, 1.442695
    %v3052 = vpow.pop %v3051
    %v3053 = vmul.f32 %v3040, 1.442695
    %v3054 = vpow.pop %v3053
    %v3055 = vmul.f32 %v3041, 1.442695
    %v3056 = vpow.pop %v3055
    %v3057 = vmul.f32 %v3042, 1.442695
    %v3058 = vpow.pop %v3057
    %v3059 = vadd.f32 %v3044, 1.0
    %v3060 = vadd.f32 %v3046, 1.0
    %v3061 = vadd.f32 %v3048, 1.0
    %v3062 = vadd.f32 %v3050, 1.0
    %v3063 = vadd.f32 %v3052, 1.0
    %v3064 = vadd.f32 %v3054, 1.0
    %v3065 = vadd.f32 %v3056, 1.0
    %v3066 = vadd.f32 %v3058, 1.0
    %v3067 = vrcp.pop %v3059
    %v3068 = vmul.f32 %v3059, %v3067
    %v3069 = vsub.f32 1.0, %v3068
    %v3070 = vmul.f32 %v3067, %v3069
    %v3071 = vadd.f32 %v3067, %v3070
    %vm3072 = vweird.f32 %v3059
    %vm3073 = vweird.f32 %v3067
    %vm3074 = vmor %vm3072, %vm3073
    %v3075 = vsel %vm3074, %v3067, %v3071
    %v3076 = vand.u32 2147483647, %v3059
    %vm3077 = vcmp.eq.f32.partialorder %v3076, 8.507059e+37
    %v3078 = vand.u32 %v3059, 2147483648
    %v3079 = vor.u32 1.1754944e-38, %v3078
    %v3080 = vsel %vm3077, %v3079, %v3075
    %v3081 = vmul.f32 1.0, %v3080
    %v3082 = vrcp.pop %v3060
    %v3083 = vmul.f32 %v3060, %v3082
    %v3084 = vsub.f32 1.0, %v3083
    %v3085 = vmul.f32 %v3082, %v3084
    %v3086 = vadd.f32 %v3082, %v3085
    %vm3087 = vweird.f32 %v3060
    %vm3088 = vweird.f32 %v3082
    %vm3089 = vmor %vm3087, %vm3088
    %v3090 = vsel %vm3089, %v3082, %v3086
    %v3091 = vand.u32 2147483647, %v3060
    %vm3092 = vcmp.eq.f32.partialorder %v3091, 8.507059e+37
    %v3093 = vand.u32 %v3060, 2147483648
    %v3094 = vor.u32 1.1754944e-38, %v3093
    %v3095 = vsel %vm3092, %v3094, %v3090
    %v3096 = vmul.f32 1.0, %v3095
    %v3097 = vrcp.pop %v3061
    %v3098 = vmul.f32 %v3061, %v3097
    %v3099 = vsub.f32 1.0, %v3098
    %v3100 = vmul.f32 %v3097, %v3099
    %v3101 = vadd.f32 %v3097, %v3100
    %vm3102 = vweird.f32 %v3061
    %vm3103 = vweird.f32 %v3097
    %vm3104 = vmor %vm3102, %vm3103
    %v3105 = vsel %vm3104, %v3097, %v3101
    %v3106 = vand.u32 2147483647, %v3061
    %vm3107 = vcmp.eq.f32.partialorder %v3106, 8.507059e+37
    %v3108 = vand.u32 %v3061, 2147483648
    %v3109 = vor.u32 1.1754944e-38, %v3108
    %v3110 = vsel %vm3107, %v3109, %v3105
    %v3111 = vmul.f32 1.0, %v3110
    %v3112 = vrcp.pop %v3062
    %v3113 = vmul.f32 %v3062, %v3112
    %v3114 = vsub.f32 1.0, %v3113
    %v3115 = vmul.f32 %v3112, %v3114
    %v3116 = vadd.f32 %v3112, %v3115
    %vm3117 = vweird.f32 %v3062
    %vm3118 = vweird.f32 %v3112
    %vm3119 = vmor %vm3117, %vm3118
    %v3120 = vsel %vm3119, %v3112, %v3116
    %v3121 = vand.u32 2147483647, %v3062
    %vm3122 = vcmp.eq.f32.partialorder %v3121, 8.507059e+37
    %v3123 = vand.u32 %v3062, 2147483648
    %v3124 = vor.u32 1.1754944e-38, %v3123
    %v3125 = vsel %vm3122, %v3124, %v3120
    %v3126 = vmul.f32 1.0, %v3125
    %v3127 = vrcp.pop %v3063
    %v3128 = vmul.f32 %v3063, %v3127
    %v3129 = vsub.f32 1.0, %v3128
    %v3130 = vmul.f32 %v3127, %v3129
    %v3131 = vadd.f32 %v3127, %v3130
    %vm3132 = vweird.f32 %v3063
    %vm3133 = vweird.f32 %v3127
    %vm3134 = vmor %vm3132, %vm3133
    %v3135 = vsel %vm3134, %v3127, %v3131
    %v3136 = vand.u32 2147483647, %v3063
    %vm3137 = vcmp.eq.f32.partialorder %v3136, 8.507059e+37
    %v3138 = vand.u32 %v3063, 2147483648
    %v3139 = vor.u32 1.1754944e-38, %v3138
    %v3140 = vsel %vm3137, %v3139, %v3135
    %v3141 = vmul.f32 1.0, %v3140
    %v3142 = vrcp.pop %v3064
    %v3143 = vmul.f32 %v3064, %v3142
    %v3144 = vsub.f32 1.0, %v3143
    %v3145 = vmul.f32 %v3142, %v3144
    %v3146 = vadd.f32 %v3142, %v3145
    %vm3147 = vweird.f32 %v3064
    %vm3148 = vweird.f32 %v3142
    %vm3149 = vmor %vm3147, %vm3148
    %v3150 = vsel %vm3149, %v3142, %v3146
    %v3151 = vand.u32 2147483647, %v3064
    %vm3152 = vcmp.eq.f32.partialorder %v3151, 8.507059e+37
    %v3153 = vand.u32 %v3064, 2147483648
    %v3154 = vor.u32 1.1754944e-38, %v3153
    %v3155 = vsel %vm3152, %v3154, %v3150
    %v3156 = vmul.f32 1.0, %v3155
    %v3157 = vrcp.pop %v3065
    %v3158 = vmul.f32 %v3065, %v3157
    %v3159 = vsub.f32 1.0, %v3158
    %v3160 = vmul.f32 %v3157, %v3159
    %v3161 = vadd.f32 %v3157, %v3160
    %vm3162 = vweird.f32 %v3065
    %vm3163 = vweird.f32 %v3157
    %vm3164 = vmor %vm3162, %vm3163
    %v3165 = vsel %vm3164, %v3157, %v3161
    %v3166 = vand.u32 2147483647, %v3065
    %vm3167 = vcmp.eq.f32.partialorder %v3166, 8.507059e+37
    %v3168 = vand.u32 %v3065, 2147483648
    %v3169 = vor.u32 1.1754944e-38, %v3168
    %v3170 = vsel %vm3167, %v3169, %v3165
    %v3171 = vmul.f32 1.0, %v3170
    %v3172 = vrcp.pop %v3066
    %v3173 = vmul.f32 %v3066, %v3172
    %v3174 = vsub.f32 1.0, %v3173
    %v3175 = vmul.f32 %v3172, %v3174
    %v3176 = vadd.f32 %v3172, %v3175
    %vm3177 = vweird.f32 %v3066
    %vm3178 = vweird.f32 %v3172
    %vm3179 = vmor %vm3177, %vm3178
    %v3180 = vsel %vm3179, %v3172, %v3176
    %v3181 = vand.u32 2147483647, %v3066
    %vm3182 = vcmp.eq.f32.partialorder %v3181, 8.507059e+37
    %v3183 = vand.u32 %v3066, 2147483648
    %v3184 = vor.u32 1.1754944e-38, %v3183
    %v3185 = vsel %vm3182, %v3184, %v3180
    %v3186 = vmul.f32 1.0, %v3185
    %3187 = vst [vmem:[#allocation11] sm:$0xff] %v3081
    %3188 = vst [vmem:[#allocation11 + $0x8] sm:$0xff] %v3096
    %3189 = vst [vmem:[#allocation11 + $0x10] sm:$0xff] %v3111
    %3190 = vst [vmem:[#allocation11 + $0x18] sm:$0xff] %v3126
    %3191 = vst [vmem:[#allocation11 + $0x20] sm:$0xff] %v3141
    %3192 = vst [vmem:[#allocation11 + $0x28] sm:$0xff] %v3156
    %3193 = vst [vmem:[#allocation11 + $0x30] sm:$0xff] %v3171
    %3194 = vst [vmem:[#allocation11 + $0x38] sm:$0xff] %v3186
    // Predicated region
    $region42: #{tpu_custom_call.1} parent=1 // pred_check
      _
    $region43: #{tpu_custom_call.1} parent=1 // pred_check_branch
      %3196 = sbr.rel (0) target = $region45
    $region44: #{tpu_custom_call.1} parent=1 // pred_region
      %3198 = vsyncadd [#allocation7], 0
      %s3199 = sshll.u32 [#allocation11], 4
      %s3200 = int_to_ptr.vmem [resolvable:$true] %s3199
      %s3201 = sshll.u32 %s7, 4
      %s3202 = int_to_ptr.hbm [resolvable:$true] %s3201
      %3207 = dma.vmem_to_hbm [thread:$0]  %s3200, 1024, %s3202, [#allocation7], 128, 128, 8
    $region45: #{tpu_custom_call.1} parent=1 // pred_fallthru
      _
    // Predicated region
    $region46: #{tpu_custom_call.1} parent=1 // pred_check
      _
    $region47: #{tpu_custom_call.1} parent=1 // pred_check_branch
      %3209 = sbr.rel (0) target = $region49
    $region48: #{tpu_custom_call.1} parent=1 // pred_region
      %3211 = dma.done [#allocation7], 1024
    $region49: #{tpu_custom_call.1} parent=1 // pred_fallthru
      _
    %3212 = vsyncpa [#allocation6], 1
    %3213 = vsyncpa [#allocation9], 1
    %3214 = vsyncpa [#allocation7], 1
  %3215 = vsyncmov [#allocation4]
  %s3216 = vpop.sfrf %3215
  %p3217 = scmp.eq.s32.totalorder %s3216, 0
  %p3218 = pneg %p3217
  %3220 = shalt.err (%p3218)
  %s3221 = scalar_lea.sflag [#allocation4], 1
  %3222 = vsyncmov %s3221
  %s3223 = vpop.sfrf %3222
  %p3224 = scmp.eq.s32.totalorder %s3223, 0
  %p3225 = pneg %p3224
  %3227 = shalt.err (%p3225)

</llo_original>
